<compile_context>
chip_gen: v7x
topology: tpu7x:2x2x1
jax: 0.10.0
libtpu: 0.0.40
codegen_flags: <defaults>
</compile_context>

<pallas_src>
import functools

import jax
import jax.numpy as jnp
from jax.experimental import pallas as pl
from jax.experimental.pallas import tpu as pltpu


def _round_up(v, m):
    return (v + m - 1) // m * m


def _build_additive_mask(edge_index, n_pad):
    """adj[dst, src] additive mask: 0 where edge (incl. self loops), -1e30 else."""
    adj = jnp.zeros((n_pad, n_pad), jnp.float32)
    adj = adj.at[edge_index[1], edge_index[0]].set(1.0)
    adj = jnp.maximum(adj, jnp.eye(n_pad, dtype=jnp.float32))  # GATConv self loops
    return jnp.where(adj > 0, 0.0, -1e30).astype(jnp.bfloat16)


def _pack_layer_params(w, att_src, att_dst, bias, heads, c):
    """Host-side packing of one GATConv layer.

    w:       [Fin, heads*c]    att_src/att_dst: [heads, c]
    bias:    [heads*c] (concat) or [c] (non-concat)
    Returns (w_packed [Fin, width], a_src [width, 8], a_dst [width, 128],
             bias_packed [1, width], width, ones_col) where head h occupies
    columns h*c:(h+1)*c of the packed width and column `ones_col` is reserved
    for the all-ones lane that yields the softmax denominator from the MXU.
    """
    assert heads <= 8, "src-logit packing assumes heads <= 8"
    fin = w.shape[0]
    ones_col = heads * c
    width = _round_up(ones_col + 1, 128)
    wp = jnp.zeros((fin, width), jnp.float32).at[:, : heads * c].set(w)
    a_src = jnp.zeros((width, 8), jnp.float32)
    a_dst = jnp.zeros((width, 128), jnp.float32)
    for h in range(heads):
        a_src = a_src.at[h * c:(h + 1) * c, h].set(att_src[h])
        a_dst = a_dst.at[h * c:(h + 1) * c, h].set(att_dst[h])
    bp = jnp.zeros((1, width), jnp.float32).at[0, : bias.shape[0]].set(bias)
    return wp, a_src, a_dst, bp, width, ones_col


def _project(x, wp, a_src, a_dst, ones_col):
    """Hoisted per-layer projections (plain XLA, computed ONCE per layer):
    xp = x @ W (bf16, with the ones-column planted), per-head source logits
    as [8, N_pad] and destination logits as [N_pad, 128]."""
    xp32 = jnp.dot(x, wp.astype(x.dtype), preferred_element_type=jnp.float32)
    src_logits = jnp.transpose(jnp.dot(xp32, a_src))   # [8, N_pad]
    dst_logits = jnp.dot(xp32, a_dst)                   # [N_pad, 128]
    xp = xp32.at[:, ones_col].set(1.0).astype(jnp.bfloat16)
    return xp, src_logits, dst_logits


def _gat_attn_kernel(dlog_ref, slog_ref, mask_ref, xp_ref, b_ref, o_ref, *,
                     heads, c, ones_col, concat, apply_elu):
    # dlog_ref : [TM, 128]     destination logits (column h = head h)
    # slog_ref : [8, N_pad]    source logits (row h = head h)
    # mask_ref : [TM, N_pad]   bf16 additive adjacency mask (streamed)
    # xp_ref   : [N_pad, W]    bf16 packed projection (head h at cols h*c, plus
    #                          an all-ones column at `ones_col`) -- resident
    # b_ref    : [1, W]        packed bias
    neg_slope = jnp.float32(0.2)
    mask = mask_ref[...].astype(jnp.float32)
    dlog = dlog_ref[...]
    slog = slog_ref[...]
    xp = xp_ref[...]
    bias = b_ref[...]
    tm = mask.shape[0]
    wout = o_ref.shape[-1]
    col = jax.lax.broadcasted_iota(jnp.int32, (tm, wout), 1)

    out = jnp.zeros((tm, wout), jnp.float32)
    for h in range(heads):
        e = dlog[:, h:h + 1] + slog[h:h + 1, :]          # [TM, N]
        e = jnp.maximum(e, neg_slope * e)                # LeakyReLU(0.2)
        e = e + mask                                     # additive adjacency mask
        e = e - jnp.max(e, axis=-1, keepdims=True)
        p = jnp.exp(e).astype(jnp.bfloat16)              # bf16 attention weights
        # bf16 MXU aggregation with f32 accumulation; column `ones_col` of xp is
        # all ones, so acc[:, ones_col] == sum(p)  (free softmax denominator).
        acc = jnp.dot(p, xp, preferred_element_type=jnp.float32)   # [TM, W]
        inv = pl.reciprocal(acc[:, ones_col:ones_col + 1], approx=True)
        vals = acc * inv                                 # deferred normalization
        if concat:
            # head h already sits at columns h*c:(h+1)*c of the packed output.
            out = jnp.where((col >= h * c) & (col < (h + 1) * c), vals, out)
        else:
            if h:  # multi-head mean: shift head h's block back to columns 0..c
                vals = pltpu.roll(vals, shift=-h * c, axis=-1)
            out = out + vals

    if not concat:
        out = jnp.where(col < c, out * jnp.float32(1.0 / heads), 0.0)
    out = out + bias
    if apply_elu:
        out = jnp.where(out > 0, out, jnp.exp(out) - 1.0)
    o_ref[...] = out.astype(o_ref.dtype)


def gat_attn_layer(xp, src_logits, dst_logits, mask, bias, *, heads, c,
                   ones_col, concat, apply_elu, tm, out_dtype):
    n_pad, width = xp.shape
    steps = n_pad // tm
    kernel = functools.partial(_gat_attn_kernel, heads=heads, c=c,
                               ones_col=ones_col, concat=concat,
                               apply_elu=apply_elu)
    out_bytes = n_pad * width * (2 if out_dtype == jnp.bfloat16 else 4)
    cost = pl.CostEstimate(
        flops=int(2 * heads * n_pad * n_pad * width + 6 * heads * n_pad * n_pad),
        transcendentals=int(heads * n_pad * n_pad),
        bytes_accessed=int(mask.size * 2 + xp.size * 2 + dst_logits.size * 4
                           + src_logits.size * 4 + bias.size * 4 + out_bytes))

    def build(single_buffer):
        # Constant-index blocks (xp / src logits / bias) do not need double
        # buffering; request a single buffer to save VMEM (critical on v7x,
        # whose 64 MiB VMEM is per TensorCore and holds a private copy of the
        # resident blocks on each core of the "parallel" axis).
        kw = {"pipeline_mode": pl.Buffered(1)} if single_buffer else {}
        in_specs = [
            pl.BlockSpec((tm, 128), lambda i: (i, 0)),              # dst logits tile
            pl.BlockSpec((8, n_pad), lambda i: (0, 0), **kw),       # src logits (resident)
            pl.BlockSpec((tm, n_pad), lambda i: (i, 0)),            # mask tile (streamed)
            pl.BlockSpec((n_pad, width), lambda i: (0, 0), **kw),   # xp (resident, bf16)
            pl.BlockSpec((1, width), lambda i: (0, 0), **kw),       # bias
        ]
        return pl.pallas_call(
            kernel,
            out_shape=jax.ShapeDtypeStruct((n_pad, width), out_dtype),
            grid_spec=pltpu.PrefetchScalarGridSpec(
                num_scalar_prefetch=0,
                grid=(steps,),
                in_specs=in_specs,
                out_specs=pl.BlockSpec((tm, width), lambda i: (i, 0)),
            ),
            compiler_params=pltpu.CompilerParams(
                dimension_semantics=("parallel",)),
            cost_estimate=cost,
        )

    args = (dst_logits, src_logits, mask, xp, bias)
    try:
        return build(True)(*args)
    except Exception:
        # pl.Buffered(1) not supported on this jax/libtpu -> default buffering.
        return build(False)(*args)


def gat_encoder_forward(x, edge_index, params, *, tm=128):
    # tm=128 matches v5e's 128-wide MXU; use tm=256 on v6e/v7x for large N.
    heads = params["heads"]
    hid = params["hid_channels"]
    out_c = params["out_channels"]
    n = x.shape[0]
    n_pad = _round_up(n, max(tm, 128))

    x_pad = jnp.pad(x.astype(jnp.float32), ((0, n_pad - n), (0, 0)))
    mask = _build_additive_mask(edge_index, n_pad)

    # ---- layer 1: GATConv(in, hid, heads, concat=True) + fused ELU ----------
    # (F.dropout / attention dropout are identity in eval mode.)
    w1p, a1s, a1d, b1p, _, ones1 = _pack_layer_params(
        params["w1"], params["a1_src"], params["a1_dst"], params["b1"], heads, hid)
    xp1, sl1, dl1 = _project(x_pad, w1p, a1s, a1d, ones1)
    h1 = gat_attn_layer(xp1, sl1, dl1, mask, b1p, heads=heads, c=hid,
                        ones_col=ones1, concat=True, apply_elu=True, tm=tm,
                        out_dtype=jnp.bfloat16)          # bf16 activations

    # ---- layer 2: GATConv(heads*hid, out, heads=1, concat=False) ------------
    fin2 = h1.shape[1]                                    # padded layer-1 width
    w2_rows = jnp.zeros((fin2, out_c), jnp.float32).at[: heads * hid, :].set(
        params["w2"])
    w2p, a2s, a2d, b2p, _, ones2 = _pack_layer_params(
        w2_rows, params["a2_src"], params["a2_dst"], params["b2"], 1, out_c)
    xp2, sl2, dl2 = _project(h1, w2p, a2s, a2d, ones2)
    out_pad = gat_attn_layer(xp2, sl2, dl2, mask, b2p, heads=1, c=out_c,
                             ones_col=ones2, concat=False, apply_elu=False,
                             tm=tm, out_dtype=jnp.float32)
    return out_pad[:n, :out_c]


def gat_encoder_reference(x, edge_index, params):
    """Pure-JAX f32 reference with identical semantics (correctness check)."""
    n = x.shape[0]
    adj = jnp.zeros((n, n), jnp.float32).at[edge_index[1], edge_index[0]].set(1.0)
    adj = jnp.maximum(adj, jnp.eye(n, dtype=jnp.float32))

    def layer(x, w, a_s, a_d, b, heads, c, concat, elu):
        xp = x @ w
        outs = []
        for h in range(heads):
            xh = xp[:, h * c:(h + 1) * c]
            s = jnp.sum(xh * a_s[h], -1)
            d = jnp.sum(xh * a_d[h], -1)
            e = d[:, None] + s[None, :]
            e = jnp.where(e > 0, e, 0.2 * e)
            e = jnp.where(adj > 0, e, -1e30)
            p = jax.nn.softmax(e, axis=-1)
            outs.append(p @ xh)
        o = jnp.concatenate(outs, -1) if concat else sum(outs) / heads
        o = o + b
        return jnp.where(o > 0, o, jnp.exp(o) - 1.0) if elu else o

    h = layer(x, params["w1"], params["a1_src"], params["a1_dst"],
              params["b1"], params["heads"], params["hid_channels"], True, True)
    return layer(h, params["w2"], params["a2_src"], params["a2_dst"],
                 params["b2"], 1, params["out_channels"], False, False)


def make_params(key, in_channels, hid_channels, heads, out_channels):
    ks = jax.random.split(key, 6)
    scale = 0.1
    return {
        "heads": heads,
        "hid_channels": hid_channels,
        "out_channels": out_channels,
        "w1": scale * jax.random.normal(ks[0], (in_channels, heads * hid_channels), jnp.float32),
        "a1_src": scale * jax.random.normal(ks[1], (heads, hid_channels), jnp.float32),
        "a1_dst": scale * jax.random.normal(ks[2], (heads, hid_channels), jnp.float32),
        "b1": jnp.zeros((heads * hid_channels,), jnp.float32),
        "w2": scale * jax.random.normal(ks[3], (heads * hid_channels, out_channels), jnp.float32),
        "a2_src": scale * jax.random.normal(ks[4], (1, out_channels), jnp.float32),
        "a2_dst": scale * jax.random.normal(ks[5], (1, out_channels), jnp.float32),
        "b2": jnp.zeros((out_channels,), jnp.float32),
    }


if __name__ == "__main__":
    key = jax.random.PRNGKey(0)
    N, in_channels, hid_channels, heads, out_channels = 8, 4, 32, 2, 16

    kx, kp = jax.random.split(key)
    x = jax.random.normal(kx, (N, in_channels), jnp.float32)

    # edge_index: bidirectional ring, PyG convention [2, E] (row0=src, row1=dst)
    src = jnp.concatenate([jnp.arange(N), (jnp.arange(N) + 1) % N])
    dst = jnp.concatenate([(jnp.arange(N) + 1) % N, jnp.arange(N)])
    edge_index = jnp.stack([src, dst], axis=0)

    params = make_params(kp, in_channels, hid_channels, heads, out_channels)

    out = gat_encoder_forward(x, edge_index, params)
    out = jax.block_until_ready(out)

    ref = gat_encoder_reference(x, edge_index, params)
    assert out.shape == (N, out_channels)
    # bf16 attention weights / bf16 aggregation + approx reciprocal -> tolerance
    # at flash-attention level vs the f32 reference.
    assert jnp.allclose(out, ref, rtol=5e-2, atol=1e-2), "mismatch vs reference"

    print("KERNEL_OK")
</pallas_src>

<mosaic_0001>
module attributes {stable_mosaic.version = 11 : i64} {
  func.func @_gat_attn_kernel(%arg0: i32, %arg1: memref<128x128xf32, #tpu.memory_space<vmem>>, %arg2: memref<8x128xf32, #tpu.memory_space<vmem>>, %arg3: memref<128x128xbf16, #tpu.memory_space<vmem>>, %arg4: memref<128x128xbf16, #tpu.memory_space<vmem>>, %arg5: memref<1x128xf32, #tpu.memory_space<vmem>>, %arg6: memref<128x128xbf16, #tpu.memory_space<vmem>>) attributes {dimension_semantics = [#tpu.dimension_semantics<parallel>], iteration_bounds = array<i64: 1>, scalar_prefetch = 0 : i64, scratch_operands = 0 : i64, tpu.core_type = #tpu.core_type<tc>, window_params = [{transform_indices = @transform_0, window_bounds = array<i64: 128, 128>}, {pipeline_mode = #tpu.pipeline_mode<synchronous>, transform_indices = @transform_1, window_bounds = array<i64: 8, 128>}, {transform_indices = @transform_2, window_bounds = array<i64: 128, 128>}, {pipeline_mode = #tpu.pipeline_mode<synchronous>, transform_indices = @transform_3, window_bounds = array<i64: 128, 128>}, {pipeline_mode = #tpu.pipeline_mode<synchronous>, transform_indices = @transform_4, window_bounds = array<i64: 1, 128>}, {transform_indices = @transform_5, window_bounds = array<i64: 128, 128>}]} {
    %c0 = arith.constant 0 : index
    %c0_0 = arith.constant 0 : index
    %0 = vector.load %arg3[%c0, %c0_0] : memref<128x128xbf16, #tpu.memory_space<vmem>>, vector<128x128xbf16>
    %1 = arith.extf %0 : vector<128x128xbf16> to vector<128x128xf32>
    %c0_1 = arith.constant 0 : index
    %c0_2 = arith.constant 0 : index
    %2 = vector.load %arg1[%c0_1, %c0_2] : memref<128x128xf32, #tpu.memory_space<vmem>>, vector<128x128xf32>
    %c0_3 = arith.constant 0 : index
    %c0_4 = arith.constant 0 : index
    %3 = vector.load %arg2[%c0_3, %c0_4] : memref<8x128xf32, #tpu.memory_space<vmem>>, vector<8x128xf32>
    %c0_5 = arith.constant 0 : index
    %c0_6 = arith.constant 0 : index
    %4 = vector.load %arg4[%c0_5, %c0_6] : memref<128x128xbf16, #tpu.memory_space<vmem>>, vector<128x128xbf16>
    %c0_7 = arith.constant 0 : index
    %c0_8 = arith.constant 0 : index
    %5 = vector.load %arg5[%c0_7, %c0_8] : memref<1x128xf32, #tpu.memory_space<vmem>>, vector<1x128xf32>
    %6 = tpu.iota {dimensions = array<i32: 1>} : vector<128x128xi32>
    %cst = arith.constant 0.000000e+00 : f32
    %7 = vector.broadcast %cst : f32 to vector<128x128xf32>
    %8 = vector.extract_strided_slice %2 {offsets = [0, 0], sizes = [128, 1], strides = [1, 1]} : vector<128x128xf32> to vector<128x1xf32>
    %9 = vector.extract_strided_slice %3 {offsets = [0, 0], sizes = [1, 128], strides = [1, 1]} : vector<8x128xf32> to vector<1x128xf32>
    %10 = vector.broadcast %8 : vector<128x1xf32> to vector<128x128xf32>
    %11 = vector.broadcast %9 : vector<1x128xf32> to vector<128x128xf32>
    %12 = arith.addf %10, %11 : vector<128x128xf32>
    %cst_9 = arith.constant 2.000000e-01 : f32
    %13 = vector.broadcast %cst_9 : f32 to vector<128x128xf32>
    %14 = arith.mulf %13, %12 : vector<128x128xf32>
    %15 = arith.maximumf %12, %14 : vector<128x128xf32>
    %16 = arith.addf %15, %1 : vector<128x128xf32>
    %cst_10 = arith.constant dense<0xFF800000> : vector<128xf32>
    %17 = vector.multi_reduction <maximumf>, %16, %cst_10 [1] : vector<128x128xf32> to vector<128xf32>
    %18 = vector.shape_cast %17 : vector<128xf32> to vector<128x1xf32>
    %19 = vector.broadcast %18 : vector<128x1xf32> to vector<128x128xf32>
    %20 = arith.subf %16, %19 : vector<128x128xf32>
    %21 = math.exp %20 : vector<128x128xf32>
    %22 = arith.truncf %21 : vector<128x128xf32> to vector<128x128xbf16>
    %cst_11 = arith.constant dense<0.000000e+00> : vector<128x128xf32>
    %23 = tpu.matmul %22, %4, %cst_11 {dimension_numbers = #tpu.dot_dimension_numbers<[1], [0], [0], [1], [0, 0, 1, 1], [], []>} : vector<128x128xbf16>, vector<128x128xbf16>, vector<128x128xf32> -> vector<128x128xf32>
    %24 = vector.extract_strided_slice %23 {offsets = [0, 64], sizes = [128, 1], strides = [1, 1]} : vector<128x128xf32> to vector<128x1xf32>
    %25 = tpu.reciprocal %24 {approx = true} : vector<128x1xf32> -> vector<128x1xf32>
    %26 = vector.broadcast %25 : vector<128x1xf32> to vector<128x128xf32>
    %27 = arith.mulf %23, %26 : vector<128x128xf32>
    %c0_i32 = arith.constant 0 : i32
    %28 = vector.broadcast %c0_i32 : i32 to vector<128x128xi32>
    %29 = arith.cmpi sge, %6, %28 : vector<128x128xi32>
    %c32_i32 = arith.constant 32 : i32
    %30 = vector.broadcast %c32_i32 : i32 to vector<128x128xi32>
    %31 = arith.cmpi slt, %6, %30 : vector<128x128xi32>
    %32 = arith.andi %29, %31 : vector<128x128xi1>
    %33 = arith.select %32, %27, %7 : vector<128x128xi1>, vector<128x128xf32>
    %34 = vector.extract_strided_slice %2 {offsets = [0, 1], sizes = [128, 1], strides = [1, 1]} : vector<128x128xf32> to vector<128x1xf32>
    %35 = vector.extract_strided_slice %3 {offsets = [1, 0], sizes = [1, 128], strides = [1, 1]} : vector<8x128xf32> to vector<1x128xf32>
    %36 = vector.broadcast %34 : vector<128x1xf32> to vector<128x128xf32>
    %37 = vector.broadcast %35 : vector<1x128xf32> to vector<128x128xf32>
    %38 = arith.addf %36, %37 : vector<128x128xf32>
    %cst_12 = arith.constant 2.000000e-01 : f32
    %39 = vector.broadcast %cst_12 : f32 to vector<128x128xf32>
    %40 = arith.mulf %39, %38 : vector<128x128xf32>
    %41 = arith.maximumf %38, %40 : vector<128x128xf32>
    %42 = arith.addf %41, %1 : vector<128x128xf32>
    %cst_13 = arith.constant dense<0xFF800000> : vector<128xf32>
    %43 = vector.multi_reduction <maximumf>, %42, %cst_13 [1] : vector<128x128xf32> to vector<128xf32>
    %44 = vector.shape_cast %43 : vector<128xf32> to vector<128x1xf32>
    %45 = vector.broadcast %44 : vector<128x1xf32> to vector<128x128xf32>
    %46 = arith.subf %42, %45 : vector<128x128xf32>
    %47 = math.exp %46 : vector<128x128xf32>
    %48 = arith.truncf %47 : vector<128x128xf32> to vector<128x128xbf16>
    %cst_14 = arith.constant dense<0.000000e+00> : vector<128x128xf32>
    %49 = tpu.matmul %48, %4, %cst_14 {dimension_numbers = #tpu.dot_dimension_numbers<[1], [0], [0], [1], [0, 0, 1, 1], [], []>} : vector<128x128xbf16>, vector<128x128xbf16>, vector<128x128xf32> -> vector<128x128xf32>
    %50 = vector.extract_strided_slice %49 {offsets = [0, 64], sizes = [128, 1], strides = [1, 1]} : vector<128x128xf32> to vector<128x1xf32>
    %51 = tpu.reciprocal %50 {approx = true} : vector<128x1xf32> -> vector<128x1xf32>
    %52 = vector.broadcast %51 : vector<128x1xf32> to vector<128x128xf32>
    %53 = arith.mulf %49, %52 : vector<128x128xf32>
    %c32_i32_15 = arith.constant 32 : i32
    %54 = vector.broadcast %c32_i32_15 : i32 to vector<128x128xi32>
    %55 = arith.cmpi sge, %6, %54 : vector<128x128xi32>
    %c64_i32 = arith.constant 64 : i32
    %56 = vector.broadcast %c64_i32 : i32 to vector<128x128xi32>
    %57 = arith.cmpi slt, %6, %56 : vector<128x128xi32>
    %58 = arith.andi %55, %57 : vector<128x128xi1>
    %59 = arith.select %58, %53, %33 : vector<128x128xi1>, vector<128x128xf32>
    %60 = vector.broadcast %5 : vector<1x128xf32> to vector<128x128xf32>
    %61 = arith.addf %59, %60 : vector<128x128xf32>
    %cst_16 = arith.constant 0.000000e+00 : f32
    %62 = vector.broadcast %cst_16 : f32 to vector<128x128xf32>
    %63 = arith.cmpf ogt, %61, %62 : vector<128x128xf32>
    %64 = math.exp %61 : vector<128x128xf32>
    %cst_17 = arith.constant 1.000000e+00 : f32
    %65 = vector.broadcast %cst_17 : f32 to vector<128x128xf32>
    %66 = arith.subf %64, %65 : vector<128x128xf32>
    %67 = arith.select %63, %61, %66 : vector<128x128xi1>, vector<128x128xf32>
    %68 = arith.truncf %67 : vector<128x128xf32> to vector<128x128xbf16>
    %c0_18 = arith.constant 0 : index
    %c0_19 = arith.constant 0 : index
    %69 = vector.load %arg6[%c0_18, %c0_19] : memref<128x128xbf16, #tpu.memory_space<vmem>>, vector<128x128xbf16>
    tpu.vector_store %arg6[%c0_18, %c0_19], %68 {strides = array<i32>} : memref<128x128xbf16, #tpu.memory_space<vmem>>, vector<128x128xbf16>,
    return
  }
  func.func @transform_0(%arg0: i32) -> (i32, i32) {
    %c0_i32 = arith.constant 0 : i32
    %c0_i32_0 = arith.constant 0 : i32
    return %arg0, %c0_i32 : i32, i32
  }
  func.func @transform_1(%arg0: i32) -> (i32, i32) {
    %c0_i32 = arith.constant 0 : i32
    %c0_i32_0 = arith.constant 0 : i32
    %c0_i32_1 = arith.constant 0 : i32
    return %c0_i32, %c0_i32_0 : i32, i32
  }
  func.func @transform_2(%arg0: i32) -> (i32, i32) {
    %c0_i32 = arith.constant 0 : i32
    %c0_i32_0 = arith.constant 0 : i32
    return %arg0, %c0_i32 : i32, i32
  }
  func.func @transform_3(%arg0: i32) -> (i32, i32) {
    %c0_i32 = arith.constant 0 : i32
    %c0_i32_0 = arith.constant 0 : i32
    %c0_i32_1 = arith.constant 0 : i32
    return %c0_i32, %c0_i32_0 : i32, i32
  }
  func.func @transform_4(%arg0: i32) -> (i32, i32) {
    %c0_i32 = arith.constant 0 : i32
    %c0_i32_0 = arith.constant 0 : i32
    %c0_i32_1 = arith.constant 0 : i32
    return %c0_i32, %c0_i32_0 : i32, i32
  }
  func.func @transform_5(%arg0: i32) -> (i32, i32) {
    %c0_i32 = arith.constant 0 : i32
    %c0_i32_0 = arith.constant 0 : i32
    return %arg0, %c0_i32 : i32, i32
  }
}

module attributes {stable_mosaic.version = 11 : i64} {
  func.func @_gat_attn_kernel(%arg0: i32, %arg1: memref<128x128xf32, #tpu.memory_space<vmem>>, %arg2: memref<8x128xf32, #tpu.memory_space<vmem>>, %arg3: memref<128x128xbf16, #tpu.memory_space<vmem>>, %arg4: memref<128x128xbf16, #tpu.memory_space<vmem>>, %arg5: memref<1x128xf32, #tpu.memory_space<vmem>>, %arg6: memref<128x128xbf16, #tpu.memory_space<vmem>>) attributes {dimension_semantics = [#tpu.dimension_semantics<parallel>], iteration_bounds = array<i64: 1>, scalar_prefetch = 0 : i64, scratch_operands = 0 : i64, tpu.core_type = #tpu.core_type<tc>, window_params = [{transform_indices = @transform_0, window_bounds = array<i64: 128, 128>}, {pipeline_mode = #tpu.pipeline_mode<synchronous>, transform_indices = @transform_1, window_bounds = array<i64: 8, 128>}, {transform_indices = @transform_2, window_bounds = array<i64: 128, 128>}, {pipeline_mode = #tpu.pipeline_mode<synchronous>, transform_indices = @transform_3, window_bounds = array<i64: 128, 128>}, {pipeline_mode = #tpu.pipeline_mode<synchronous>, transform_indices = @transform_4, window_bounds = array<i64: 1, 128>}, {transform_indices = @transform_5, window_bounds = array<i64: 128, 128>}]} {
    %c0 = arith.constant 0 : index
    %c0_0 = arith.constant 0 : index
    %0 = vector.load %arg3[%c0, %c0_0] : memref<128x128xbf16, #tpu.memory_space<vmem>>, vector<128x128xbf16>
    %1 = arith.extf %0 : vector<128x128xbf16> to vector<128x128xf32>
    %c0_1 = arith.constant 0 : index
    %c0_2 = arith.constant 0 : index
    %2 = vector.load %arg1[%c0_1, %c0_2] : memref<128x128xf32, #tpu.memory_space<vmem>>, vector<128x128xf32>
    %c0_3 = arith.constant 0 : index
    %c0_4 = arith.constant 0 : index
    %3 = vector.load %arg2[%c0_3, %c0_4] : memref<8x128xf32, #tpu.memory_space<vmem>>, vector<8x128xf32>
    %c0_5 = arith.constant 0 : index
    %c0_6 = arith.constant 0 : index
    %4 = vector.load %arg4[%c0_5, %c0_6] : memref<128x128xbf16, #tpu.memory_space<vmem>>, vector<128x128xbf16>
    %c0_7 = arith.constant 0 : index
    %c0_8 = arith.constant 0 : index
    %5 = vector.load %arg5[%c0_7, %c0_8] : memref<1x128xf32, #tpu.memory_space<vmem>>, vector<1x128xf32>
    %6 = tpu.iota {dimensions = array<i32: 1>} : vector<128x128xi32>
    %cst = arith.constant 0.000000e+00 : f32
    %7 = vector.broadcast %cst : f32 to vector<128x128xf32>
    %8 = vector.extract_strided_slice %2 {offsets = [0, 0], sizes = [128, 1], strides = [1, 1]} : vector<128x128xf32> to vector<128x1xf32>
    %9 = vector.extract_strided_slice %3 {offsets = [0, 0], sizes = [1, 128], strides = [1, 1]} : vector<8x128xf32> to vector<1x128xf32>
    %10 = vector.broadcast %8 : vector<128x1xf32> to vector<128x128xf32>
    %11 = vector.broadcast %9 : vector<1x128xf32> to vector<128x128xf32>
    %12 = arith.addf %10, %11 : vector<128x128xf32>
    %cst_9 = arith.constant 2.000000e-01 : f32
    %13 = vector.broadcast %cst_9 : f32 to vector<128x128xf32>
    %14 = arith.mulf %13, %12 : vector<128x128xf32>
    %15 = arith.maximumf %12, %14 : vector<128x128xf32>
    %16 = arith.addf %15, %1 : vector<128x128xf32>
    %cst_10 = arith.constant dense<0xFF800000> : vector<128xf32>
    %17 = vector.multi_reduction <maximumf>, %16, %cst_10 [1] : vector<128x128xf32> to vector<128xf32>
    %18 = vector.shape_cast %17 : vector<128xf32> to vector<128x1xf32>
    %19 = vector.broadcast %18 : vector<128x1xf32> to vector<128x128xf32>
    %20 = arith.subf %16, %19 : vector<128x128xf32>
    %21 = math.exp %20 : vector<128x128xf32>
    %22 = arith.truncf %21 : vector<128x128xf32> to vector<128x128xbf16>
    %cst_11 = arith.constant dense<0.000000e+00> : vector<128x128xf32>
    %23 = tpu.matmul %22, %4, %cst_11 {dimension_numbers = #tpu.dot_dimension_numbers<[1], [0], [0], [1], [0, 0, 1, 1], [], []>} : vector<128x128xbf16>, vector<128x128xbf16>, vector<128x128xf32> -> vector<128x128xf32>
    %24 = vector.extract_strided_slice %23 {offsets = [0, 64], sizes = [128, 1], strides = [1, 1]} : vector<128x128xf32> to vector<128x1xf32>
    %25 = tpu.reciprocal %24 {approx = true} : vector<128x1xf32> -> vector<128x1xf32>
    %26 = vector.broadcast %25 : vector<128x1xf32> to vector<128x128xf32>
    %27 = arith.mulf %23, %26 : vector<128x128xf32>
    %c0_i32 = arith.constant 0 : i32
    %28 = vector.broadcast %c0_i32 : i32 to vector<128x128xi32>
    %29 = arith.cmpi sge, %6, %28 : vector<128x128xi32>
    %c32_i32 = arith.constant 32 : i32
    %30 = vector.broadcast %c32_i32 : i32 to vector<128x128xi32>
    %31 = arith.cmpi slt, %6, %30 : vector<128x128xi32>
    %32 = arith.andi %29, %31 : vector<128x128xi1>
    %33 = arith.select %32, %27, %7 : vector<128x128xi1>, vector<128x128xf32>
    %34 = vector.extract_strided_slice %2 {offsets = [0, 1], sizes = [128, 1], strides = [1, 1]} : vector<128x128xf32> to vector<128x1xf32>
    %35 = vector.extract_strided_slice %3 {offsets = [1, 0], sizes = [1, 128], strides = [1, 1]} : vector<8x128xf32> to vector<1x128xf32>
    %36 = vector.broadcast %34 : vector<128x1xf32> to vector<128x128xf32>
    %37 = vector.broadcast %35 : vector<1x128xf32> to vector<128x128xf32>
    %38 = arith.addf %36, %37 : vector<128x128xf32>
    %cst_12 = arith.constant 2.000000e-01 : f32
    %39 = vector.broadcast %cst_12 : f32 to vector<128x128xf32>
    %40 = arith.mulf %39, %38 : vector<128x128xf32>
    %41 = arith.maximumf %38, %40 : vector<128x128xf32>
    %42 = arith.addf %41, %1 : vector<128x128xf32>
    %cst_13 = arith.constant dense<0xFF800000> : vector<128xf32>
    %43 = vector.multi_reduction <maximumf>, %42, %cst_13 [1] : vector<128x128xf32> to vector<128xf32>
    %44 = vector.shape_cast %43 : vector<128xf32> to vector<128x1xf32>
    %45 = vector.broadcast %44 : vector<128x1xf32> to vector<128x128xf32>
    %46 = arith.subf %42, %45 : vector<128x128xf32>
    %47 = math.exp %46 : vector<128x128xf32>
    %48 = arith.truncf %47 : vector<128x128xf32> to vector<128x128xbf16>
    %cst_14 = arith.constant dense<0.000000e+00> : vector<128x128xf32>
    %49 = tpu.matmul %48, %4, %cst_14 {dimension_numbers = #tpu.dot_dimension_numbers<[1], [0], [0], [1], [0, 0, 1, 1], [], []>} : vector<128x128xbf16>, vector<128x128xbf16>, vector<128x128xf32> -> vector<128x128xf32>
    %50 = vector.extract_strided_slice %49 {offsets = [0, 64], sizes = [128, 1], strides = [1, 1]} : vector<128x128xf32> to vector<128x1xf32>
    %51 = tpu.reciprocal %50 {approx = true} : vector<128x1xf32> -> vector<128x1xf32>
    %52 = vector.broadcast %51 : vector<128x1xf32> to vector<128x128xf32>
    %53 = arith.mulf %49, %52 : vector<128x128xf32>
    %c32_i32_15 = arith.constant 32 : i32
    %54 = vector.broadcast %c32_i32_15 : i32 to vector<128x128xi32>
    %55 = arith.cmpi sge, %6, %54 : vector<128x128xi32>
    %c64_i32 = arith.constant 64 : i32
    %56 = vector.broadcast %c64_i32 : i32 to vector<128x128xi32>
    %57 = arith.cmpi slt, %6, %56 : vector<128x128xi32>
    %58 = arith.andi %55, %57 : vector<128x128xi1>
    %59 = arith.select %58, %53, %33 : vector<128x128xi1>, vector<128x128xf32>
    %60 = vector.broadcast %5 : vector<1x128xf32> to vector<128x128xf32>
    %61 = arith.addf %59, %60 : vector<128x128xf32>
    %cst_16 = arith.constant 0.000000e+00 : f32
    %62 = vector.broadcast %cst_16 : f32 to vector<128x128xf32>
    %63 = arith.cmpf ogt, %61, %62 : vector<128x128xf32>
    %64 = math.exp %61 : vector<128x128xf32>
    %cst_17 = arith.constant 1.000000e+00 : f32
    %65 = vector.broadcast %cst_17 : f32 to vector<128x128xf32>
    %66 = arith.subf %64, %65 : vector<128x128xf32>
    %67 = arith.select %63, %61, %66 : vector<128x128xi1>, vector<128x128xf32>
    %68 = arith.truncf %67 : vector<128x128xf32> to vector<128x128xbf16>
    %c0_18 = arith.constant 0 : index
    %c0_19 = arith.constant 0 : index
    %69 = vector.load %arg6[%c0_18, %c0_19] : memref<128x128xbf16, #tpu.memory_space<vmem>>, vector<128x128xbf16>
    tpu.vector_store %arg6[%c0_18, %c0_19], %68 {strides = array<i32>} : memref<128x128xbf16, #tpu.memory_space<vmem>>, vector<128x128xbf16>,
    return
  }
  func.func @transform_0(%arg0: i32) -> (i32, i32) {
    %c0_i32 = arith.constant 0 : i32
    %c0_i32_0 = arith.constant 0 : i32
    return %arg0, %c0_i32 : i32, i32
  }
  func.func @transform_1(%arg0: i32) -> (i32, i32) {
    %c0_i32 = arith.constant 0 : i32
    %c0_i32_0 = arith.constant 0 : i32
    %c0_i32_1 = arith.constant 0 : i32
    return %c0_i32, %c0_i32_0 : i32, i32
  }
  func.func @transform_2(%arg0: i32) -> (i32, i32) {
    %c0_i32 = arith.constant 0 : i32
    %c0_i32_0 = arith.constant 0 : i32
    return %arg0, %c0_i32 : i32, i32
  }
  func.func @transform_3(%arg0: i32) -> (i32, i32) {
    %c0_i32 = arith.constant 0 : i32
    %c0_i32_0 = arith.constant 0 : i32
    %c0_i32_1 = arith.constant 0 : i32
    return %c0_i32, %c0_i32_0 : i32, i32
  }
  func.func @transform_4(%arg0: i32) -> (i32, i32) {
    %c0_i32 = arith.constant 0 : i32
    %c0_i32_0 = arith.constant 0 : i32
    %c0_i32_1 = arith.constant 0 : i32
    return %c0_i32, %c0_i32_0 : i32, i32
  }
  func.func @transform_5(%arg0: i32) -> (i32, i32) {
    %c0_i32 = arith.constant 0 : i32
    %c0_i32_0 = arith.constant 0 : i32
    return %arg0, %c0_i32 : i32, i32
  }
}

</mosaic_0001>

<llo_original>
// kernel: tpu_custom_call.1
$region0: #{tpu_custom_call.1}
  #allocation0 [shape = 'u32[]', space=smem, size = 0x4, offset = 0x4, fixed_abs, tag = 'smem constant byte address 0x4 - core index']
  #allocation1 [shape = 'u32[144,128]{1,0:T(1,128)}', space=vmem, size = 0x12000, scoped, tag = 'internal scratch']
  %s0 = inlined_call_operand.hbm [shape: f32[128,128], index: 0, kind: input, shape index: {}]
  %s1 = inlined_call_operand.hbm [shape: f32[8,128], index: 1, kind: input, shape index: {}]
  %s2 = inlined_call_operand.hbm [shape: bf16[128,128], index: 2, kind: input, shape index: {}]
  %s3 = inlined_call_operand.hbm [shape: bf16[128,128], index: 3, kind: input, shape index: {}]
  %s4 = inlined_call_operand.vmem [shape: f32[1,128], index: 4, kind: input, shape index: {}]
  %s5 = inlined_call_operand.hbm [shape: bf16[128,128], index: 5, kind: output, shape index: {}]
  %s6 = sld [smem:[#allocation0]]
  $region46: #{tpu_custom_call.1} parent=0
    _
  %s8 = ssub.s32 1, %s6
  %s9 = scalar_select 0, %s8, %s6
  $region1: #{tpu_custom_call.1} parent=0
    #allocation2 [shape = 'u8[65536]{0}', space=vmem, size = 0x10000, scoped, tag = 'input window, operand 0, single buffered']
    #allocation3 [shape = 's32[1]{0}', space=sflag, size = 0x4, scoped, tag = 'scoped memory for tpu_custom_call.1']
    #allocation4 [shape = 's32[1]{0}', space=sflag, size = 0x4, scoped, tag = 'scoped memory for tpu_custom_call.1']
    #allocation5 [shape = 'u8[4096]{0}', space=vmem, size = 0x1000, scoped, tag = 'input window, operand 1, single buffered']
    #allocation6 [shape = 's32[1]{0}', space=sflag, size = 0x4, scoped, tag = 'scoped memory for tpu_custom_call.1']
    #allocation7 [shape = 'u8[32768]{0}', space=vmem, size = 0x8000, scoped, tag = 'input window, operand 2, single buffered']
    #allocation8 [shape = 'u8[32768]{0}', space=vmem, size = 0x8000, scoped, tag = 'input window, operand 3, single buffered']
    #allocation9 [shape = 's32[1]{0}', space=sflag, size = 0x4, scoped, tag = 'scoped memory for tpu_custom_call.1']
    #allocation10 [shape = 'u8[32768]{0}', space=vmem, size = 0x8000, scoped, tag = 'output window, operand 0, single buffered']
    %10 = vsyncpa [#allocation3], 0
    %11 = vsyncpa [#allocation6], 0
    %12 = vsyncpa [#allocation9], 0
    %13 = vsyncpa [#allocation4], 0
    // Predicated region
    $region2: #{tpu_custom_call.1} parent=1 // pred_check
      _
    $region3: #{tpu_custom_call.1} parent=1 // pred_check_branch
      %15 = sbr.rel (0) target = $region5
    $region4: #{tpu_custom_call.1} parent=1 // pred_region
      %s17 = ssub.s32 2048, 2048
      %18 = vsyncadd [#allocation3], %s17
      %s19 = sshll.u32 [#allocation2], 4
      %s20 = int_to_ptr.vmem [resolvable:$true] %s19
      %25 = dma.hbm_to_vmem [thread:$0]  %s0, 2048, %s20, [#allocation3], 128, 128, 8
    $region5: #{tpu_custom_call.1} parent=1 // pred_fallthru
      _
    // Predicated region
    $region6: #{tpu_custom_call.1} parent=1 // pred_check
      _
    $region7: #{tpu_custom_call.1} parent=1 // pred_check_branch
      %27 = sbr.rel (0) target = $region9
    $region8: #{tpu_custom_call.1} parent=1 // pred_region
      %s29 = ssub.s32 128, 128
      %30 = vsyncadd [#allocation6], %s29
      %s32 = sshll.u32 [#allocation5], 4
      %s33 = int_to_ptr.vmem [resolvable:$true] %s32
      %35 = dma.hbm_to_vmem [thread:$0]  %s1, 128, %s33, [#allocation6]
    $region9: #{tpu_custom_call.1} parent=1 // pred_fallthru
      _
    // Predicated region
    $region10: #{tpu_custom_call.1} parent=1 // pred_check
      _
    $region11: #{tpu_custom_call.1} parent=1 // pred_check_branch
      %37 = sbr.rel (0) target = $region13
    $region12: #{tpu_custom_call.1} parent=1 // pred_region
      %s39 = ssub.s32 1024, 1024
      %40 = vsyncadd [#allocation6], %s39
      %s41 = sshll.u32 [#allocation7], 4
      %s42 = int_to_ptr.vmem [resolvable:$true] %s41
      %47 = dma.hbm_to_vmem [thread:$0]  %s2, 1024, %s42, [#allocation6], 64, 64, 4
    $region13: #{tpu_custom_call.1} parent=1 // pred_fallthru
      _
    // Predicated region
    $region14: #{tpu_custom_call.1} parent=1 // pred_check
      _
    $region15: #{tpu_custom_call.1} parent=1 // pred_check_branch
      %49 = sbr.rel (0) target = $region17
    $region16: #{tpu_custom_call.1} parent=1 // pred_region
      %s51 = ssub.s32 1024, 1024
      %52 = vsyncadd [#allocation9], %s51
      %s53 = sshll.u32 [#allocation8], 4
      %s54 = int_to_ptr.vmem [resolvable:$true] %s53
      %59 = dma.hbm_to_vmem [thread:$0]  %s3, 1024, %s54, [#allocation9], 64, 64, 4
    $region17: #{tpu_custom_call.1} parent=1 // pred_fallthru
      _
    // Predicated region
    $region18: #{tpu_custom_call.1} parent=1 // pred_check
      _
    $region19: #{tpu_custom_call.1} parent=1 // pred_check_branch
      %61 = sbr.rel (0) target = $region21
    $region20: #{tpu_custom_call.1} parent=1 // pred_region
      _
    $region21: #{tpu_custom_call.1} parent=1 // pred_fallthru
      _
    // Predicated region
    $region22: #{tpu_custom_call.1} parent=1 // pred_check
      _
    $region23: #{tpu_custom_call.1} parent=1 // pred_check_branch
      %63 = sbr.rel (0) target = $region25
    $region24: #{tpu_custom_call.1} parent=1 // pred_region
      %64 = dma.done [#allocation3], 2048
    $region25: #{tpu_custom_call.1} parent=1 // pred_fallthru
      _
    // Predicated region
    $region26: #{tpu_custom_call.1} parent=1 // pred_check
      _
    $region27: #{tpu_custom_call.1} parent=1 // pred_check_branch
      %66 = sbr.rel (0) target = $region29
    $region28: #{tpu_custom_call.1} parent=1 // pred_region
      %67 = dma.done [#allocation6], 128
    $region29: #{tpu_custom_call.1} parent=1 // pred_fallthru
      _
    // Predicated region
    $region30: #{tpu_custom_call.1} parent=1 // pred_check
      _
    $region31: #{tpu_custom_call.1} parent=1 // pred_check_branch
      %69 = sbr.rel (0) target = $region33
    $region32: #{tpu_custom_call.1} parent=1 // pred_region
      %70 = dma.done [#allocation6], 1024
    $region33: #{tpu_custom_call.1} parent=1 // pred_fallthru
      _
    // Predicated region
    $region34: #{tpu_custom_call.1} parent=1 // pred_check
      _
    $region35: #{tpu_custom_call.1} parent=1 // pred_check_branch
      %72 = sbr.rel (0) target = $region37
    $region36: #{tpu_custom_call.1} parent=1 // pred_region
      %73 = dma.done [#allocation9], 1024
    $region37: #{tpu_custom_call.1} parent=1 // pred_fallthru
      _
    %v75 = vld [vmem:[#allocation7] sm:$0xf]
    %v76 = vld [vmem:[#allocation7 + $0x4] sm:$0xf]
    %v77 = vld [vmem:[#allocation7 + $0x8] sm:$0xf]
    %v78 = vld [vmem:[#allocation7 + $0xc] sm:$0xf]
    %v79 = vld [vmem:[#allocation7 + $0x10] sm:$0xf]
    %v80 = vld [vmem:[#allocation7 + $0x14] sm:$0xf]
    %v81 = vld [vmem:[#allocation7 + $0x18] sm:$0xf]
    %v82 = vld [vmem:[#allocation7 + $0x1c] sm:$0xf]
    %v83 = vld [vmem:[#allocation7 + $0x20] sm:$0xf]
    %v84 = vld [vmem:[#allocation7 + $0x24] sm:$0xf]
    %v85 = vld [vmem:[#allocation7 + $0x28] sm:$0xf]
    %v86 = vld [vmem:[#allocation7 + $0x2c] sm:$0xf]
    %v87 = vld [vmem:[#allocation7 + $0x30] sm:$0xf]
    %v88 = vld [vmem:[#allocation7 + $0x34] sm:$0xf]
    %v89 = vld [vmem:[#allocation7 + $0x38] sm:$0xf]
    %v90 = vld [vmem:[#allocation7 + $0x3c] sm:$0xf]
    %v91 = vunpack.c.l.bf16 %v75
    %v92 = vunpack.c.l.bf16 %v76
    %v93 = vunpack.c.l.bf16 %v77
    %v94 = vunpack.c.l.bf16 %v78
    %v95 = vunpack.c.l.bf16 %v79
    %v96 = vunpack.c.l.bf16 %v80
    %v97 = vunpack.c.l.bf16 %v81
    %v98 = vunpack.c.l.bf16 %v82
    %v99 = vunpack.c.l.bf16 %v83
    %v100 = vunpack.c.l.bf16 %v84
    %v101 = vunpack.c.l.bf16 %v85
    %v102 = vunpack.c.l.bf16 %v86
    %v103 = vunpack.c.l.bf16 %v87
    %v104 = vunpack.c.l.bf16 %v88
    %v105 = vunpack.c.l.bf16 %v89
    %v106 = vunpack.c.l.bf16 %v90
    %v107 = vld [vmem:[#allocation2] sm:$0xff]
    %v108 = vld [vmem:[#allocation2 + $0x8] sm:$0xff]
    %v109 = vld [vmem:[#allocation2 + $0x10] sm:$0xff]
    %v110 = vld [vmem:[#allocation2 + $0x18] sm:$0xff]
    %v111 = vld [vmem:[#allocation2 + $0x20] sm:$0xff]
    %v112 = vld [vmem:[#allocation2 + $0x28] sm:$0xff]
    %v113 = vld [vmem:[#allocation2 + $0x30] sm:$0xff]
    %v114 = vld [vmem:[#allocation2 + $0x38] sm:$0xff]
    %v115 = vld [vmem:[#allocation2 + $0x40] sm:$0xff]
    %v116 = vld [vmem:[#allocation2 + $0x48] sm:$0xff]
    %v117 = vld [vmem:[#allocation2 + $0x50] sm:$0xff]
    %v118 = vld [vmem:[#allocation2 + $0x58] sm:$0xff]
    %v119 = vld [vmem:[#allocation2 + $0x60] sm:$0xff]
    %v120 = vld [vmem:[#allocation2 + $0x68] sm:$0xff]
    %v121 = vld [vmem:[#allocation2 + $0x70] sm:$0xff]
    %v122 = vld [vmem:[#allocation2 + $0x78] sm:$0xff]
    %v123 = vld [vmem:[#allocation5] sm:$0xff]
    %v124 = vld [vmem:[#allocation8] sm:$0xf]
    %v125 = vld [vmem:[#allocation8 + $0x4] sm:$0xf]
    %v126 = vld [vmem:[#allocation8 + $0x8] sm:$0xf]
    %v127 = vld [vmem:[#allocation8 + $0xc] sm:$0xf]
    %v128 = vld [vmem:[#allocation8 + $0x10] sm:$0xf]
    %v129 = vld [vmem:[#allocation8 + $0x14] sm:$0xf]
    %v130 = vld [vmem:[#allocation8 + $0x18] sm:$0xf]
    %v131 = vld [vmem:[#allocation8 + $0x1c] sm:$0xf]
    %v132 = vld [vmem:[#allocation8 + $0x20] sm:$0xf]
    %v133 = vld [vmem:[#allocation8 + $0x24] sm:$0xf]
    %v134 = vld [vmem:[#allocation8 + $0x28] sm:$0xf]
    %v135 = vld [vmem:[#allocation8 + $0x2c] sm:$0xf]
    %v136 = vld [vmem:[#allocation8 + $0x30] sm:$0xf]
    %v137 = vld [vmem:[#allocation8 + $0x34] sm:$0xf]
    %v138 = vld [vmem:[#allocation8 + $0x38] sm:$0xf]
    %v139 = vld [vmem:[#allocation8 + $0x3c] sm:$0xf]
    %v140 = vld [vmem:[%s4] sm:$0x1]
    %v141 = vlaneseq
    %v142 = vand.u32 %v141, 127
    %144 = vset.pattern.permute.xlu0 0
    %145 = vperm.xlu0 %144, %v107
    %v146 = vpop.permute.xlu0 %145
    %149 = vset.pattern.permute.xlu0 0
    %150 = vperm.xlu0 %149, %v108
    %v151 = vpop.permute.xlu0 %150
    %154 = vset.pattern.permute.xlu0 0
    %155 = vperm.xlu0 %154, %v109
    %v156 = vpop.permute.xlu0 %155
    %159 = vset.pattern.permute.xlu0 0
    %160 = vperm.xlu0 %159, %v110
    %v161 = vpop.permute.xlu0 %160
    %164 = vset.pattern.permute.xlu0 0
    %165 = vperm.xlu0 %164, %v111
    %v166 = vpop.permute.xlu0 %165
    %169 = vset.pattern.permute.xlu0 0
    %170 = vperm.xlu0 %169, %v112
    %v171 = vpop.permute.xlu0 %170
    %174 = vset.pattern.permute.xlu0 0
    %175 = vperm.xlu0 %174, %v113
    %v176 = vpop.permute.xlu0 %175
    %179 = vset.pattern.permute.xlu0 0
    %180 = vperm.xlu0 %179, %v114
    %v181 = vpop.permute.xlu0 %180
    %184 = vset.pattern.permute.xlu0 0
    %185 = vperm.xlu0 %184, %v115
    %v186 = vpop.permute.xlu0 %185
    %189 = vset.pattern.permute.xlu0 0
    %190 = vperm.xlu0 %189, %v116
    %v191 = vpop.permute.xlu0 %190
    %194 = vset.pattern.permute.xlu0 0
    %195 = vperm.xlu0 %194, %v117
    %v196 = vpop.permute.xlu0 %195
    %199 = vset.pattern.permute.xlu0 0
    %200 = vperm.xlu0 %199, %v118
    %v201 = vpop.permute.xlu0 %200
    %204 = vset.pattern.permute.xlu0 0
    %205 = vperm.xlu0 %204, %v119
    %v206 = vpop.permute.xlu0 %205
    %209 = vset.pattern.permute.xlu0 0
    %210 = vperm.xlu0 %209, %v120
    %v211 = vpop.permute.xlu0 %210
    %214 = vset.pattern.permute.xlu0 0
    %215 = vperm.xlu0 %214, %v121
    %v216 = vpop.permute.xlu0 %215
    %219 = vset.pattern.permute.xlu0 0
    %220 = vperm.xlu0 %219, %v122
    %v221 = vpop.permute.xlu0 %220
    %v223 = vlaneseq
    %v224 = vshrl.u32 %v223, 7
    %v225 = vsub.s32 0, %v224
    %v226 = vrot.slane %v123, %v225
    %v227 = vadd.f32 %v146, %v226
    %v228 = vadd.f32 %v151, %v226
    %v229 = vadd.f32 %v156, %v226
    %v230 = vadd.f32 %v161, %v226
    %v231 = vadd.f32 %v166, %v226
    %v232 = vadd.f32 %v171, %v226
    %v233 = vadd.f32 %v176, %v226
    %v234 = vadd.f32 %v181, %v226
    %v235 = vadd.f32 %v186, %v226
    %v236 = vadd.f32 %v191, %v226
    %v237 = vadd.f32 %v196, %v226
    %v238 = vadd.f32 %v201, %v226
    %v239 = vadd.f32 %v206, %v226
    %v240 = vadd.f32 %v211, %v226
    %v241 = vadd.f32 %v216, %v226
    %v242 = vadd.f32 %v221, %v226
    %v243 = vmul.f32 %v227, 0.2
    %v244 = vmul.f32 %v228, 0.2
    %v245 = vmul.f32 %v229, 0.2
    %v246 = vmul.f32 %v230, 0.2
    %v247 = vmul.f32 %v231, 0.2
    %v248 = vmul.f32 %v232, 0.2
    %v249 = vmul.f32 %v233, 0.2
    %v250 = vmul.f32 %v234, 0.2
    %v251 = vmul.f32 %v235, 0.2
    %v252 = vmul.f32 %v236, 0.2
    %v253 = vmul.f32 %v237, 0.2
    %v254 = vmul.f32 %v238, 0.2
    %v255 = vmul.f32 %v239, 0.2
    %v256 = vmul.f32 %v240, 0.2
    %v257 = vmul.f32 %v241, 0.2
    %v258 = vmul.f32 %v242, 0.2
    %v259 = vmax.f32 %v227, %v243
    %v260 = vmax.f32 %v228, %v244
    %v261 = vmax.f32 %v229, %v245
    %v262 = vmax.f32 %v230, %v246
    %v263 = vmax.f32 %v231, %v247
    %v264 = vmax.f32 %v232, %v248
    %v265 = vmax.f32 %v233, %v249
    %v266 = vmax.f32 %v234, %v250
    %v267 = vmax.f32 %v235, %v251
    %v268 = vmax.f32 %v236, %v252
    %v269 = vmax.f32 %v237, %v253
    %v270 = vmax.f32 %v238, %v254
    %v271 = vmax.f32 %v239, %v255
    %v272 = vmax.f32 %v240, %v256
    %v273 = vmax.f32 %v241, %v257
    %v274 = vmax.f32 %v242, %v258
    %v275 = vadd.f32 %v259, %v91
    %v276 = vadd.f32 %v260, %v92
    %v277 = vadd.f32 %v261, %v93
    %v278 = vadd.f32 %v262, %v94
    %v279 = vadd.f32 %v263, %v95
    %v280 = vadd.f32 %v264, %v96
    %v281 = vadd.f32 %v265, %v97
    %v282 = vadd.f32 %v266, %v98
    %v283 = vadd.f32 %v267, %v99
    %v284 = vadd.f32 %v268, %v100
    %v285 = vadd.f32 %v269, %v101
    %v286 = vadd.f32 %v270, %v102
    %v287 = vadd.f32 %v271, %v103
    %v288 = vadd.f32 %v272, %v104
    %v289 = vadd.f32 %v273, %v105
    %v290 = vadd.f32 %v274, %v106
    %291 = vmax.xlane.f32.xlu0 %v275
    %v292 = vpop.xlane.xlu0 %291
    %293 = vmax.xlane.f32.xlu0 %v276
    %v294 = vpop.xlane.xlu0 %293
    %295 = vmax.xlane.f32.xlu0 %v277
    %v296 = vpop.xlane.xlu0 %295
    %297 = vmax.xlane.f32.xlu0 %v278
    %v298 = vpop.xlane.xlu0 %297
    %299 = vmax.xlane.f32.xlu0 %v279
    %v300 = vpop.xlane.xlu0 %299
    %301 = vmax.xlane.f32.xlu0 %v280
    %v302 = vpop.xlane.xlu0 %301
    %303 = vmax.xlane.f32.xlu0 %v281
    %v304 = vpop.xlane.xlu0 %303
    %305 = vmax.xlane.f32.xlu0 %v282
    %v306 = vpop.xlane.xlu0 %305
    %307 = vmax.xlane.f32.xlu0 %v283
    %v308 = vpop.xlane.xlu0 %307
    %309 = vmax.xlane.f32.xlu0 %v284
    %v310 = vpop.xlane.xlu0 %309
    %311 = vmax.xlane.f32.xlu0 %v285
    %v312 = vpop.xlane.xlu0 %311
    %313 = vmax.xlane.f32.xlu0 %v286
    %v314 = vpop.xlane.xlu0 %313
    %315 = vmax.xlane.f32.xlu0 %v287
    %v316 = vpop.xlane.xlu0 %315
    %317 = vmax.xlane.f32.xlu0 %v288
    %v318 = vpop.xlane.xlu0 %317
    %319 = vmax.xlane.f32.xlu0 %v289
    %v320 = vpop.xlane.xlu0 %319
    %321 = vmax.xlane.f32.xlu0 %v290
    %v322 = vpop.xlane.xlu0 %321
    %v323 = vsub.f32 %v275, %v292
    %v324 = vsub.f32 %v276, %v294
    %v325 = vsub.f32 %v277, %v296
    %v326 = vsub.f32 %v278, %v298
    %v327 = vsub.f32 %v279, %v300
    %v328 = vsub.f32 %v280, %v302
    %v329 = vsub.f32 %v281, %v304
    %v330 = vsub.f32 %v282, %v306
    %v331 = vsub.f32 %v283, %v308
    %v332 = vsub.f32 %v284, %v310
    %v333 = vsub.f32 %v285, %v312
    %v334 = vsub.f32 %v286, %v314
    %v335 = vsub.f32 %v287, %v316
    %v336 = vsub.f32 %v288, %v318
    %v337 = vsub.f32 %v289, %v320
    %v338 = vsub.f32 %v290, %v322
    %v339 = vmul.f32 %v323, 1.442695
    %v340 = vpow.pop %v339
    %v341 = vmul.f32 %v324, 1.442695
    %v342 = vpow.pop %v341
    %v343 = vmul.f32 %v325, 1.442695
    %v344 = vpow.pop %v343
    %v345 = vmul.f32 %v326, 1.442695
    %v346 = vpow.pop %v345
    %v347 = vmul.f32 %v327, 1.442695
    %v348 = vpow.pop %v347
    %v349 = vmul.f32 %v328, 1.442695
    %v350 = vpow.pop %v349
    %v351 = vmul.f32 %v329, 1.442695
    %v352 = vpow.pop %v351
    %v353 = vmul.f32 %v330, 1.442695
    %v354 = vpow.pop %v353
    %v355 = vmul.f32 %v331, 1.442695
    %v356 = vpow.pop %v355
    %v357 = vmul.f32 %v332, 1.442695
    %v358 = vpow.pop %v357
    %v359 = vmul.f32 %v333, 1.442695
    %v360 = vpow.pop %v359
    %v361 = vmul.f32 %v334, 1.442695
    %v362 = vpow.pop %v361
    %v363 = vmul.f32 %v335, 1.442695
    %v364 = vpow.pop %v363
    %v365 = vmul.f32 %v336, 1.442695
    %v366 = vpow.pop %v365
    %v367 = vmul.f32 %v337, 1.442695
    %v368 = vpow.pop %v367
    %v369 = vmul.f32 %v338, 1.442695
    %v370 = vpow.pop %v369
    %v371 = vpack.c.bf16 %v342, %v340
    %v372 = vpack.c.bf16 %v346, %v344
    %v373 = vpack.c.bf16 %v350, %v348
    %v374 = vpack.c.bf16 %v354, %v352
    %v375 = vpack.c.bf16 %v358, %v356
    %v376 = vpack.c.bf16 %v362, %v360
    %v377 = vpack.c.bf16 %v366, %v364
    %v378 = vpack.c.bf16 %v370, %v368
    %v395 = vunpack.c.l.b16 %v124
    %v396 = vunpack.c.l.b16 %v125
    %v397 = vunpack.c.l.b16 %v126
    %v398 = vunpack.c.l.b16 %v127
    %v399 = vunpack.c.l.b16 %v128
    %v400 = vunpack.c.l.b16 %v129
    %v401 = vunpack.c.l.b16 %v130
    %v402 = vunpack.c.l.b16 %v131
    %v403 = vunpack.c.l.b16 %v132
    %v404 = vunpack.c.l.b16 %v133
    %v405 = vunpack.c.l.b16 %v134
    %v406 = vunpack.c.l.b16 %v135
    %v407 = vunpack.c.l.b16 %v136
    %v408 = vunpack.c.l.b16 %v137
    %v409 = vunpack.c.l.b16 %v138
    %v410 = vunpack.c.l.b16 %v139
    %v411 = vpack.c.b16 %v396, %v395
    %v412 = vpack.c.b16 %v398, %v397
    %v413 = vpack.c.b16 %v400, %v399
    %v414 = vpack.c.b16 %v402, %v401
    %v415 = vpack.c.b16 %v404, %v403
    %v416 = vpack.c.b16 %v406, %v405
    %v417 = vpack.c.b16 %v408, %v407
    %v418 = vpack.c.b16 %v410, %v409
    %427 = vmatprep.subr.bf16.mxu0 0
    %428 = vmatpush1.bf16.msra.mxu0 %v411
    %429 = vmatprep.subr.bf16.mxu0 0
    %430 = vmatpush1.bf16.msra.mxu0 %v412
    %431 = vmatprep.subr.bf16.mxu0 0
    %432 = vmatpush1.bf16.msra.mxu0 %v413
    %433 = vmatprep.subr.bf16.mxu0 0
    %434 = vmatpush1.bf16.msra.mxu0 %v414
    %435 = vmatprep.subr.bf16.mxu0 0
    %436 = vmatpush1.bf16.msra.mxu0 %v415
    %437 = vmatprep.subr.bf16.mxu0 0
    %438 = vmatpush1.bf16.msra.mxu0 %v416
    %439 = vmatprep.subr.bf16.mxu0 0
    %440 = vmatpush1.bf16.msra.mxu0 %v417
    %441 = vmatprep.subr.bf16.mxu0 0
    %442 = vmatpush1.bf16.msra.mxu0 %v418
    %443 = vmatprep.subr.bf16.mxu0 0
    %444 = vmatpush1.bf16.msra.mxu0 0
    %445 = vmatprep.subr.bf16.mxu0 0
    %446 = vmatpush1.bf16.msra.mxu0 0
    %447 = vmatprep.subr.bf16.mxu0 0
    %448 = vmatpush1.bf16.msra.mxu0 0
    %449 = vmatprep.subr.bf16.mxu0 0
    %450 = vmatpush1.bf16.msra.mxu0 0
    %451 = vmatprep.subr.bf16.mxu0 0
    %452 = vmatpush1.bf16.msra.mxu0 0
    %453 = vmatprep.subr.bf16.mxu0 0
    %454 = vmatpush1.bf16.msra.mxu0 0
    %455 = vmatprep.subr.bf16.mxu0 0
    %456 = vmatpush1.bf16.msra.mxu0 0
    %457 = vmatprep.subr.bf16.mxu0 0
    %458 = vmatpush1.bf16.msra.mxu0 0
    %459 = vmatprep.mubr.bf16.mxu0 0
    %460 = vmatmul.mubr.bf16.gmra.mrb[0].mxu0 %v371
    %v461 = vpop.f32.mrb[0].mxu0
    %v462 = vadd.f32 0.0, %v461
    %v463 = vpop.f32.mrb[0].mxu0
    %v464 = vpop.f32.mrb[0].mxu0
    %v465 = vadd.f32 0.0, %v464
    %v466 = vpop.f32.mrb[0].mxu0
    %467 = vmatprep.mubr.bf16.mxu0 0
    %468 = vmatmul.mubr.bf16.gmra.mrb[0].mxu0 %v372
    %v469 = vpop.f32.mrb[0].mxu0
    %v470 = vadd.f32 0.0, %v469
    %v471 = vpop.f32.mrb[0].mxu0
    %v472 = vpop.f32.mrb[0].mxu0
    %v473 = vadd.f32 0.0, %v472
    %v474 = vpop.f32.mrb[0].mxu0
    %475 = vmatprep.mubr.bf16.mxu0 0
    %476 = vmatmul.mubr.bf16.gmra.mrb[0].mxu0 %v373
    %v477 = vpop.f32.mrb[0].mxu0
    %v478 = vadd.f32 0.0, %v477
    %v479 = vpop.f32.mrb[0].mxu0
    %v480 = vpop.f32.mrb[0].mxu0
    %v481 = vadd.f32 0.0, %v480
    %v482 = vpop.f32.mrb[0].mxu0
    %483 = vmatprep.mubr.bf16.mxu0 0
    %484 = vmatmul.mubr.bf16.gmra.mrb[0].mxu0 %v374
    %v485 = vpop.f32.mrb[0].mxu0
    %v486 = vadd.f32 0.0, %v485
    %v487 = vpop.f32.mrb[0].mxu0
    %v488 = vpop.f32.mrb[0].mxu0
    %v489 = vadd.f32 0.0, %v488
    %v490 = vpop.f32.mrb[0].mxu0
    %491 = vmatprep.mubr.bf16.mxu0 0
    %492 = vmatmul.mubr.bf16.gmra.mrb[0].mxu0 %v375
    %v493 = vpop.f32.mrb[0].mxu0
    %v494 = vadd.f32 0.0, %v493
    %v495 = vpop.f32.mrb[0].mxu0
    %v496 = vpop.f32.mrb[0].mxu0
    %v497 = vadd.f32 0.0, %v496
    %v498 = vpop.f32.mrb[0].mxu0
    %499 = vmatprep.mubr.bf16.mxu0 0
    %500 = vmatmul.mubr.bf16.gmra.mrb[0].mxu0 %v376
    %v501 = vpop.f32.mrb[0].mxu0
    %v502 = vadd.f32 0.0, %v501
    %v503 = vpop.f32.mrb[0].mxu0
    %v504 = vpop.f32.mrb[0].mxu0
    %v505 = vadd.f32 0.0, %v504
    %v506 = vpop.f32.mrb[0].mxu0
    %507 = vmatprep.mubr.bf16.mxu0 0
    %508 = vmatmul.mubr.bf16.gmra.mrb[0].mxu0 %v377
    %v509 = vpop.f32.mrb[0].mxu0
    %v510 = vadd.f32 0.0, %v509
    %v511 = vpop.f32.mrb[0].mxu0
    %v512 = vpop.f32.mrb[0].mxu0
    %v513 = vadd.f32 0.0, %v512
    %v514 = vpop.f32.mrb[0].mxu0
    %515 = vmatprep.mubr.bf16.mxu0 0
    %516 = vmatmul.mubr.bf16.gmra.mrb[0].mxu0 %v378
    %v517 = vpop.f32.mrb[0].mxu0
    %v518 = vadd.f32 0.0, %v517
    %v519 = vpop.f32.mrb[0].mxu0
    %v520 = vpop.f32.mrb[0].mxu0
    %v521 = vadd.f32 0.0, %v520
    %v522 = vpop.f32.mrb[0].mxu0
    %523 = vdwg.mxu0
    %v524 = vrcp.pop %v462
    %v525 = vrcp.pop %v465
    %v526 = vrcp.pop %v470
    %v527 = vrcp.pop %v473
    %v528 = vrcp.pop %v478
    %v529 = vrcp.pop %v481
    %v530 = vrcp.pop %v486
    %v531 = vrcp.pop %v489
    %v532 = vrcp.pop %v494
    %v533 = vrcp.pop %v497
    %v534 = vrcp.pop %v502
    %v535 = vrcp.pop %v505
    %v536 = vrcp.pop %v510
    %v537 = vrcp.pop %v513
    %v538 = vrcp.pop %v518
    %v539 = vrcp.pop %v521
    %541 = vset.pattern.permute.xlu0 64
    %542 = vperm.xlu0 %541, %v524
    %v543 = vpop.permute.xlu0 %542
    %546 = vset.pattern.permute.xlu0 64
    %547 = vperm.xlu0 %546, %v525
    %v548 = vpop.permute.xlu0 %547
    %551 = vset.pattern.permute.xlu0 64
    %552 = vperm.xlu0 %551, %v526
    %v553 = vpop.permute.xlu0 %552
    %556 = vset.pattern.permute.xlu0 64
    %557 = vperm.xlu0 %556, %v527
    %v558 = vpop.permute.xlu0 %557
    %561 = vset.pattern.permute.xlu0 64
    %562 = vperm.xlu0 %561, %v528
    %v563 = vpop.permute.xlu0 %562
    %566 = vset.pattern.permute.xlu0 64
    %567 = vperm.xlu0 %566, %v529
    %v568 = vpop.permute.xlu0 %567
    %571 = vset.pattern.permute.xlu0 64
    %572 = vperm.xlu0 %571, %v530
    %v573 = vpop.permute.xlu0 %572
    %576 = vset.pattern.permute.xlu0 64
    %577 = vperm.xlu0 %576, %v531
    %v578 = vpop.permute.xlu0 %577
    %581 = vset.pattern.permute.xlu0 64
    %582 = vperm.xlu0 %581, %v532
    %v583 = vpop.permute.xlu0 %582
    %586 = vset.pattern.permute.xlu0 64
    %587 = vperm.xlu0 %586, %v533
    %v588 = vpop.permute.xlu0 %587
    %591 = vset.pattern.permute.xlu0 64
    %592 = vperm.xlu0 %591, %v534
    %v593 = vpop.permute.xlu0 %592
    %596 = vset.pattern.permute.xlu0 64
    %597 = vperm.xlu0 %596, %v535
    %v598 = vpop.permute.xlu0 %597
    %601 = vset.pattern.permute.xlu0 64
    %602 = vperm.xlu0 %601, %v536
    %v603 = vpop.permute.xlu0 %602
    %606 = vset.pattern.permute.xlu0 64
    %607 = vperm.xlu0 %606, %v537
    %v608 = vpop.permute.xlu0 %607
    %611 = vset.pattern.permute.xlu0 64
    %612 = vperm.xlu0 %611, %v538
    %v613 = vpop.permute.xlu0 %612
    %616 = vset.pattern.permute.xlu0 64
    %617 = vperm.xlu0 %616, %v539
    %v618 = vpop.permute.xlu0 %617
    %v620 = vmul.f32 %v462, %v543
    %v621 = vmul.f32 %v465, %v548
    %v622 = vmul.f32 %v470, %v553
    %v623 = vmul.f32 %v473, %v558
    %v624 = vmul.f32 %v478, %v563
    %v625 = vmul.f32 %v481, %v568
    %v626 = vmul.f32 %v486, %v573
    %v627 = vmul.f32 %v489, %v578
    %v628 = vmul.f32 %v494, %v583
    %v629 = vmul.f32 %v497, %v588
    %v630 = vmul.f32 %v502, %v593
    %v631 = vmul.f32 %v505, %v598
    %v632 = vmul.f32 %v510, %v603
    %v633 = vmul.f32 %v513, %v608
    %v634 = vmul.f32 %v518, %v613
    %v635 = vmul.f32 %v521, %v618
    %vm636 = vcmp.ge.s32.totalorder %v142, 0
    %vm637 = vcmp.lt.s32.totalorder %v142, 32
    %vm638 = vmand %vm636, %vm637
    %v639 = vsel %vm638, %v620, 0.0
    %v640 = vsel %vm638, %v621, 0.0
    %v641 = vsel %vm638, %v622, 0.0
    %v642 = vsel %vm638, %v623, 0.0
    %v643 = vsel %vm638, %v624, 0.0
    %v644 = vsel %vm638, %v625, 0.0
    %v645 = vsel %vm638, %v626, 0.0
    %v646 = vsel %vm638, %v627, 0.0
    %v647 = vsel %vm638, %v628, 0.0
    %v648 = vsel %vm638, %v629, 0.0
    %v649 = vsel %vm638, %v630, 0.0
    %v650 = vsel %vm638, %v631, 0.0
    %v651 = vsel %vm638, %v632, 0.0
    %v652 = vsel %vm638, %v633, 0.0
    %v653 = vsel %vm638, %v634, 0.0
    %v654 = vsel %vm638, %v635, 0.0
    %655 = vset.pattern.permute.xlu0 1
    %656 = vperm.xlu0 %655, %v107
    %v657 = vpop.permute.xlu0 %656
    %659 = vset.pattern.permute.xlu0 1
    %660 = vperm.xlu0 %659, %v108
    %v661 = vpop.permute.xlu0 %660
    %663 = vset.pattern.permute.xlu0 1
    %664 = vperm.xlu0 %663, %v109
    %v665 = vpop.permute.xlu0 %664
    %667 = vset.pattern.permute.xlu0 1
    %668 = vperm.xlu0 %667, %v110
    %v669 = vpop.permute.xlu0 %668
    %671 = vset.pattern.permute.xlu0 1
    %672 = vperm.xlu0 %671, %v111
    %v673 = vpop.permute.xlu0 %672
    %675 = vset.pattern.permute.xlu0 1
    %676 = vperm.xlu0 %675, %v112
    %v677 = vpop.permute.xlu0 %676
    %679 = vset.pattern.permute.xlu0 1
    %680 = vperm.xlu0 %679, %v113
    %v681 = vpop.permute.xlu0 %680
    %683 = vset.pattern.permute.xlu0 1
    %684 = vperm.xlu0 %683, %v114
    %v685 = vpop.permute.xlu0 %684
    %687 = vset.pattern.permute.xlu0 1
    %688 = vperm.xlu0 %687, %v115
    %v689 = vpop.permute.xlu0 %688
    %691 = vset.pattern.permute.xlu0 1
    %692 = vperm.xlu0 %691, %v116
    %v693 = vpop.permute.xlu0 %692
    %695 = vset.pattern.permute.xlu0 1
    %696 = vperm.xlu0 %695, %v117
    %v697 = vpop.permute.xlu0 %696
    %699 = vset.pattern.permute.xlu0 1
    %700 = vperm.xlu0 %699, %v118
    %v701 = vpop.permute.xlu0 %700
    %703 = vset.pattern.permute.xlu0 1
    %704 = vperm.xlu0 %703, %v119
    %v705 = vpop.permute.xlu0 %704
    %707 = vset.pattern.permute.xlu0 1
    %708 = vperm.xlu0 %707, %v120
    %v709 = vpop.permute.xlu0 %708
    %711 = vset.pattern.permute.xlu0 1
    %712 = vperm.xlu0 %711, %v121
    %v713 = vpop.permute.xlu0 %712
    %715 = vset.pattern.permute.xlu0 1
    %716 = vperm.xlu0 %715, %v122
    %v717 = vpop.permute.xlu0 %716
    %v719 = vlaneseq
    %v720 = vshrl.u32 %v719, 7
    %v721 = vsub.s32 1, %v720
    %v722 = vrot.slane %v123, %v721
    %v723 = vadd.f32 %v657, %v722
    %v724 = vadd.f32 %v661, %v722
    %v725 = vadd.f32 %v665, %v722
    %v726 = vadd.f32 %v669, %v722
    %v727 = vadd.f32 %v673, %v722
    %v728 = vadd.f32 %v677, %v722
    %v729 = vadd.f32 %v681, %v722
    %v730 = vadd.f32 %v685, %v722
    %v731 = vadd.f32 %v689, %v722
    %v732 = vadd.f32 %v693, %v722
    %v733 = vadd.f32 %v697, %v722
    %v734 = vadd.f32 %v701, %v722
    %v735 = vadd.f32 %v705, %v722
    %v736 = vadd.f32 %v709, %v722
    %v737 = vadd.f32 %v713, %v722
    %v738 = vadd.f32 %v717, %v722
    %v739 = vmul.f32 %v723, 0.2
    %v740 = vmul.f32 %v724, 0.2
    %v741 = vmul.f32 %v725, 0.2
    %v742 = vmul.f32 %v726, 0.2
    %v743 = vmul.f32 %v727, 0.2
    %v744 = vmul.f32 %v728, 0.2
    %v745 = vmul.f32 %v729, 0.2
    %v746 = vmul.f32 %v730, 0.2
    %v747 = vmul.f32 %v731, 0.2
    %v748 = vmul.f32 %v732, 0.2
    %v749 = vmul.f32 %v733, 0.2
    %v750 = vmul.f32 %v734, 0.2
    %v751 = vmul.f32 %v735, 0.2
    %v752 = vmul.f32 %v736, 0.2
    %v753 = vmul.f32 %v737, 0.2
    %v754 = vmul.f32 %v738, 0.2
    %v755 = vmax.f32 %v723, %v739
    %v756 = vmax.f32 %v724, %v740
    %v757 = vmax.f32 %v725, %v741
    %v758 = vmax.f32 %v726, %v742
    %v759 = vmax.f32 %v727, %v743
    %v760 = vmax.f32 %v728, %v744
    %v761 = vmax.f32 %v729, %v745
    %v762 = vmax.f32 %v730, %v746
    %v763 = vmax.f32 %v731, %v747
    %v764 = vmax.f32 %v732, %v748
    %v765 = vmax.f32 %v733, %v749
    %v766 = vmax.f32 %v734, %v750
    %v767 = vmax.f32 %v735, %v751
    %v768 = vmax.f32 %v736, %v752
    %v769 = vmax.f32 %v737, %v753
    %v770 = vmax.f32 %v738, %v754
    %v771 = vadd.f32 %v755, %v91
    %v772 = vadd.f32 %v756, %v92
    %v773 = vadd.f32 %v757, %v93
    %v774 = vadd.f32 %v758, %v94
    %v775 = vadd.f32 %v759, %v95
    %v776 = vadd.f32 %v760, %v96
    %v777 = vadd.f32 %v761, %v97
    %v778 = vadd.f32 %v762, %v98
    %v779 = vadd.f32 %v763, %v99
    %v780 = vadd.f32 %v764, %v100
    %v781 = vadd.f32 %v765, %v101
    %v782 = vadd.f32 %v766, %v102
    %v783 = vadd.f32 %v767, %v103
    %v784 = vadd.f32 %v768, %v104
    %v785 = vadd.f32 %v769, %v105
    %v786 = vadd.f32 %v770, %v106
    %787 = vmax.xlane.f32.xlu0 %v771
    %v788 = vpop.xlane.xlu0 %787
    %789 = vmax.xlane.f32.xlu0 %v772
    %v790 = vpop.xlane.xlu0 %789
    %791 = vmax.xlane.f32.xlu0 %v773
    %v792 = vpop.xlane.xlu0 %791
    %793 = vmax.xlane.f32.xlu0 %v774
    %v794 = vpop.xlane.xlu0 %793
    %795 = vmax.xlane.f32.xlu0 %v775
    %v796 = vpop.xlane.xlu0 %795
    %797 = vmax.xlane.f32.xlu0 %v776
    %v798 = vpop.xlane.xlu0 %797
    %799 = vmax.xlane.f32.xlu0 %v777
    %v800 = vpop.xlane.xlu0 %799
    %801 = vmax.xlane.f32.xlu0 %v778
    %v802 = vpop.xlane.xlu0 %801
    %803 = vmax.xlane.f32.xlu0 %v779
    %v804 = vpop.xlane.xlu0 %803
    %805 = vmax.xlane.f32.xlu0 %v780
    %v806 = vpop.xlane.xlu0 %805
    %807 = vmax.xlane.f32.xlu0 %v781
    %v808 = vpop.xlane.xlu0 %807
    %809 = vmax.xlane.f32.xlu0 %v782
    %v810 = vpop.xlane.xlu0 %809
    %811 = vmax.xlane.f32.xlu0 %v783
    %v812 = vpop.xlane.xlu0 %811
    %813 = vmax.xlane.f32.xlu0 %v784
    %v814 = vpop.xlane.xlu0 %813
    %815 = vmax.xlane.f32.xlu0 %v785
    %v816 = vpop.xlane.xlu0 %815
    %817 = vmax.xlane.f32.xlu0 %v786
    %v818 = vpop.xlane.xlu0 %817
    %v819 = vsub.f32 %v771, %v788
    %v820 = vsub.f32 %v772, %v790
    %v821 = vsub.f32 %v773, %v792
    %v822 = vsub.f32 %v774, %v794
    %v823 = vsub.f32 %v775, %v796
    %v824 = vsub.f32 %v776, %v798
    %v825 = vsub.f32 %v777, %v800
    %v826 = vsub.f32 %v778, %v802
    %v827 = vsub.f32 %v779, %v804
    %v828 = vsub.f32 %v780, %v806
    %v829 = vsub.f32 %v781, %v808
    %v830 = vsub.f32 %v782, %v810
    %v831 = vsub.f32 %v783, %v812
    %v832 = vsub.f32 %v784, %v814
    %v833 = vsub.f32 %v785, %v816
    %v834 = vsub.f32 %v786, %v818
    %v835 = vmul.f32 %v819, 1.442695
    %v836 = vpow.pop %v835
    %v837 = vmul.f32 %v820, 1.442695
    %v838 = vpow.pop %v837
    %v839 = vmul.f32 %v821, 1.442695
    %v840 = vpow.pop %v839
    %v841 = vmul.f32 %v822, 1.442695
    %v842 = vpow.pop %v841
    %v843 = vmul.f32 %v823, 1.442695
    %v844 = vpow.pop %v843
    %v845 = vmul.f32 %v824, 1.442695
    %v846 = vpow.pop %v845
    %v847 = vmul.f32 %v825, 1.442695
    %v848 = vpow.pop %v847
    %v849 = vmul.f32 %v826, 1.442695
    %v850 = vpow.pop %v849
    %v851 = vmul.f32 %v827, 1.442695
    %v852 = vpow.pop %v851
    %v853 = vmul.f32 %v828, 1.442695
    %v854 = vpow.pop %v853
    %v855 = vmul.f32 %v829, 1.442695
    %v856 = vpow.pop %v855
    %v857 = vmul.f32 %v830, 1.442695
    %v858 = vpow.pop %v857
    %v859 = vmul.f32 %v831, 1.442695
    %v860 = vpow.pop %v859
    %v861 = vmul.f32 %v832, 1.442695
    %v862 = vpow.pop %v861
    %v863 = vmul.f32 %v833, 1.442695
    %v864 = vpow.pop %v863
    %v865 = vmul.f32 %v834, 1.442695
    %v866 = vpow.pop %v865
    %v867 = vpack.c.bf16 %v838, %v836
    %v868 = vpack.c.bf16 %v842, %v840
    %v869 = vpack.c.bf16 %v846, %v844
    %v870 = vpack.c.bf16 %v850, %v848
    %v871 = vpack.c.bf16 %v854, %v852
    %v872 = vpack.c.bf16 %v858, %v856
    %v873 = vpack.c.bf16 %v862, %v860
    %v874 = vpack.c.bf16 %v866, %v864
    %875 = vmatprep.subr.bf16.mxu0 0
    %876 = vmatpush1.bf16.msra.mxu0 %v411
    %877 = vmatprep.subr.bf16.mxu0 0
    %878 = vmatpush1.bf16.msra.mxu0 %v412
    %879 = vmatprep.subr.bf16.mxu0 0
    %880 = vmatpush1.bf16.msra.mxu0 %v413
    %881 = vmatprep.subr.bf16.mxu0 0
    %882 = vmatpush1.bf16.msra.mxu0 %v414
    %883 = vmatprep.subr.bf16.mxu0 0
    %884 = vmatpush1.bf16.msra.mxu0 %v415
    %885 = vmatprep.subr.bf16.mxu0 0
    %886 = vmatpush1.bf16.msra.mxu0 %v416
    %887 = vmatprep.subr.bf16.mxu0 0
    %888 = vmatpush1.bf16.msra.mxu0 %v417
    %889 = vmatprep.subr.bf16.mxu0 0
    %890 = vmatpush1.bf16.msra.mxu0 %v418
    %891 = vmatprep.subr.bf16.mxu0 0
    %892 = vmatpush1.bf16.msra.mxu0 0
    %893 = vmatprep.subr.bf16.mxu0 0
    %894 = vmatpush1.bf16.msra.mxu0 0
    %895 = vmatprep.subr.bf16.mxu0 0
    %896 = vmatpush1.bf16.msra.mxu0 0
    %897 = vmatprep.subr.bf16.mxu0 0
    %898 = vmatpush1.bf16.msra.mxu0 0
    %899 = vmatprep.subr.bf16.mxu0 0
    %900 = vmatpush1.bf16.msra.mxu0 0
    %901 = vmatprep.subr.bf16.mxu0 0
    %902 = vmatpush1.bf16.msra.mxu0 0
    %903 = vmatprep.subr.bf16.mxu0 0
    %904 = vmatpush1.bf16.msra.mxu0 0
    %905 = vmatprep.subr.bf16.mxu0 0
    %906 = vmatpush1.bf16.msra.mxu0 0
    %907 = vmatprep.mubr.bf16.mxu0 0
    %908 = vmatmul.mubr.bf16.gmra.mrb[0].mxu0 %v867
    %v909 = vpop.f32.mrb[0].mxu0
    %v910 = vadd.f32 0.0, %v909
    %v911 = vpop.f32.mrb[0].mxu0
    %v912 = vpop.f32.mrb[0].mxu0
    %v913 = vadd.f32 0.0, %v912
    %v914 = vpop.f32.mrb[0].mxu0
    %915 = vmatprep.mubr.bf16.mxu0 0
    %916 = vmatmul.mubr.bf16.gmra.mrb[0].mxu0 %v868
    %v917 = vpop.f32.mrb[0].mxu0
    %v918 = vadd.f32 0.0, %v917
    %v919 = vpop.f32.mrb[0].mxu0
    %v920 = vpop.f32.mrb[0].mxu0
    %v921 = vadd.f32 0.0, %v920
    %v922 = vpop.f32.mrb[0].mxu0
    %923 = vmatprep.mubr.bf16.mxu0 0
    %924 = vmatmul.mubr.bf16.gmra.mrb[0].mxu0 %v869
    %v925 = vpop.f32.mrb[0].mxu0
    %v926 = vadd.f32 0.0, %v925
    %v927 = vpop.f32.mrb[0].mxu0
    %v928 = vpop.f32.mrb[0].mxu0
    %v929 = vadd.f32 0.0, %v928
    %v930 = vpop.f32.mrb[0].mxu0
    %931 = vmatprep.mubr.bf16.mxu0 0
    %932 = vmatmul.mubr.bf16.gmra.mrb[0].mxu0 %v870
    %v933 = vpop.f32.mrb[0].mxu0
    %v934 = vadd.f32 0.0, %v933
    %v935 = vpop.f32.mrb[0].mxu0
    %v936 = vpop.f32.mrb[0].mxu0
    %v937 = vadd.f32 0.0, %v936
    %v938 = vpop.f32.mrb[0].mxu0
    %939 = vmatprep.mubr.bf16.mxu0 0
    %940 = vmatmul.mubr.bf16.gmra.mrb[0].mxu0 %v871
    %v941 = vpop.f32.mrb[0].mxu0
    %v942 = vadd.f32 0.0, %v941
    %v943 = vpop.f32.mrb[0].mxu0
    %v944 = vpop.f32.mrb[0].mxu0
    %v945 = vadd.f32 0.0, %v944
    %v946 = vpop.f32.mrb[0].mxu0
    %947 = vmatprep.mubr.bf16.mxu0 0
    %948 = vmatmul.mubr.bf16.gmra.mrb[0].mxu0 %v872
    %v949 = vpop.f32.mrb[0].mxu0
    %v950 = vadd.f32 0.0, %v949
    %v951 = vpop.f32.mrb[0].mxu0
    %v952 = vpop.f32.mrb[0].mxu0
    %v953 = vadd.f32 0.0, %v952
    %v954 = vpop.f32.mrb[0].mxu0
    %955 = vmatprep.mubr.bf16.mxu0 0
    %956 = vmatmul.mubr.bf16.gmra.mrb[0].mxu0 %v873
    %v957 = vpop.f32.mrb[0].mxu0
    %v958 = vadd.f32 0.0, %v957
    %v959 = vpop.f32.mrb[0].mxu0
    %v960 = vpop.f32.mrb[0].mxu0
    %v961 = vadd.f32 0.0, %v960
    %v962 = vpop.f32.mrb[0].mxu0
    %963 = vmatprep.mubr.bf16.mxu0 0
    %964 = vmatmul.mubr.bf16.gmra.mrb[0].mxu0 %v874
    %v965 = vpop.f32.mrb[0].mxu0
    %v966 = vadd.f32 0.0, %v965
    %v967 = vpop.f32.mrb[0].mxu0
    %v968 = vpop.f32.mrb[0].mxu0
    %v969 = vadd.f32 0.0, %v968
    %v970 = vpop.f32.mrb[0].mxu0
    %971 = vdwg.mxu0
    %v972 = vrcp.pop %v910
    %v973 = vrcp.pop %v913
    %v974 = vrcp.pop %v918
    %v975 = vrcp.pop %v921
    %v976 = vrcp.pop %v926
    %v977 = vrcp.pop %v929
    %v978 = vrcp.pop %v934
    %v979 = vrcp.pop %v937
    %v980 = vrcp.pop %v942
    %v981 = vrcp.pop %v945
    %v982 = vrcp.pop %v950
    %v983 = vrcp.pop %v953
    %v984 = vrcp.pop %v958
    %v985 = vrcp.pop %v961
    %v986 = vrcp.pop %v966
    %v987 = vrcp.pop %v969
    %989 = vset.pattern.permute.xlu0 64
    %990 = vperm.xlu0 %989, %v972
    %v991 = vpop.permute.xlu0 %990
    %994 = vset.pattern.permute.xlu0 64
    %995 = vperm.xlu0 %994, %v973
    %v996 = vpop.permute.xlu0 %995
    %999 = vset.pattern.permute.xlu0 64
    %1000 = vperm.xlu0 %999, %v974
    %v1001 = vpop.permute.xlu0 %1000
    %1004 = vset.pattern.permute.xlu0 64
    %1005 = vperm.xlu0 %1004, %v975
    %v1006 = vpop.permute.xlu0 %1005
    %1009 = vset.pattern.permute.xlu0 64
    %1010 = vperm.xlu0 %1009, %v976
    %v1011 = vpop.permute.xlu0 %1010
    %1014 = vset.pattern.permute.xlu0 64
    %1015 = vperm.xlu0 %1014, %v977
    %v1016 = vpop.permute.xlu0 %1015
    %1019 = vset.pattern.permute.xlu0 64
    %1020 = vperm.xlu0 %1019, %v978
    %v1021 = vpop.permute.xlu0 %1020
    %1024 = vset.pattern.permute.xlu0 64
    %1025 = vperm.xlu0 %1024, %v979
    %v1026 = vpop.permute.xlu0 %1025
    %1029 = vset.pattern.permute.xlu0 64
    %1030 = vperm.xlu0 %1029, %v980
    %v1031 = vpop.permute.xlu0 %1030
    %1034 = vset.pattern.permute.xlu0 64
    %1035 = vperm.xlu0 %1034, %v981
    %v1036 = vpop.permute.xlu0 %1035
    %1039 = vset.pattern.permute.xlu0 64
    %1040 = vperm.xlu0 %1039, %v982
    %v1041 = vpop.permute.xlu0 %1040
    %1044 = vset.pattern.permute.xlu0 64
    %1045 = vperm.xlu0 %1044, %v983
    %v1046 = vpop.permute.xlu0 %1045
    %1049 = vset.pattern.permute.xlu0 64
    %1050 = vperm.xlu0 %1049, %v984
    %v1051 = vpop.permute.xlu0 %1050
    %1054 = vset.pattern.permute.xlu0 64
    %1055 = vperm.xlu0 %1054, %v985
    %v1056 = vpop.permute.xlu0 %1055
    %1059 = vset.pattern.permute.xlu0 64
    %1060 = vperm.xlu0 %1059, %v986
    %v1061 = vpop.permute.xlu0 %1060
    %1064 = vset.pattern.permute.xlu0 64
    %1065 = vperm.xlu0 %1064, %v987
    %v1066 = vpop.permute.xlu0 %1065
    %v1068 = vmul.f32 %v910, %v991
    %v1069 = vmul.f32 %v913, %v996
    %v1070 = vmul.f32 %v918, %v1001
    %v1071 = vmul.f32 %v921, %v1006
    %v1072 = vmul.f32 %v926, %v1011
    %v1073 = vmul.f32 %v929, %v1016
    %v1074 = vmul.f32 %v934, %v1021
    %v1075 = vmul.f32 %v937, %v1026
    %v1076 = vmul.f32 %v942, %v1031
    %v1077 = vmul.f32 %v945, %v1036
    %v1078 = vmul.f32 %v950, %v1041
    %v1079 = vmul.f32 %v953, %v1046
    %v1080 = vmul.f32 %v958, %v1051
    %v1081 = vmul.f32 %v961, %v1056
    %v1082 = vmul.f32 %v966, %v1061
    %v1083 = vmul.f32 %v969, %v1066
    %vm1084 = vcmp.ge.s32.totalorder %v142, 32
    %vm1085 = vcmp.lt.s32.totalorder %v142, 64
    %vm1086 = vmand %vm1084, %vm1085
    %v1087 = vsel %vm1086, %v1068, %v639
    %v1088 = vsel %vm1086, %v1069, %v640
    %v1089 = vsel %vm1086, %v1070, %v641
    %v1090 = vsel %vm1086, %v1071, %v642
    %v1091 = vsel %vm1086, %v1072, %v643
    %v1092 = vsel %vm1086, %v1073, %v644
    %v1093 = vsel %vm1086, %v1074, %v645
    %v1094 = vsel %vm1086, %v1075, %v646
    %v1095 = vsel %vm1086, %v1076, %v647
    %v1096 = vsel %vm1086, %v1077, %v648
    %v1097 = vsel %vm1086, %v1078, %v649
    %v1098 = vsel %vm1086, %v1079, %v650
    %v1099 = vsel %vm1086, %v1080, %v651
    %v1100 = vsel %vm1086, %v1081, %v652
    %v1101 = vsel %vm1086, %v1082, %v653
    %v1102 = vsel %vm1086, %v1083, %v654
    %v1104 = vlaneseq
    %v1105 = vshrl.u32 %v1104, 7
    %v1106 = vsub.s32 0, %v1105
    %v1107 = vrot.slane %v140, %v1106
    %v1109 = vadd.f32 %v1087, %v1107
    %v1110 = vadd.f32 %v1088, %v1107
    %v1111 = vadd.f32 %v1089, %v1107
    %v1112 = vadd.f32 %v1090, %v1107
    %v1113 = vadd.f32 %v1091, %v1107
    %v1114 = vadd.f32 %v1092, %v1107
    %v1115 = vadd.f32 %v1093, %v1107
    %v1116 = vadd.f32 %v1094, %v1107
    %v1117 = vadd.f32 %v1095, %v1107
    %v1118 = vadd.f32 %v1096, %v1107
    %v1119 = vadd.f32 %v1097, %v1107
    %v1120 = vadd.f32 %v1098, %v1107
    %v1121 = vadd.f32 %v1099, %v1107
    %v1122 = vadd.f32 %v1100, %v1107
    %v1123 = vadd.f32 %v1101, %v1107
    %v1124 = vadd.f32 %v1102, %v1107
    %vm1125 = vcmp.gt.f32.partialorder %v1109, 0.0
    %vm1126 = vcmp.gt.f32.partialorder %v1110, 0.0
    %vm1127 = vcmp.gt.f32.partialorder %v1111, 0.0
    %vm1128 = vcmp.gt.f32.partialorder %v1112, 0.0
    %vm1129 = vcmp.gt.f32.partialorder %v1113, 0.0
    %vm1130 = vcmp.gt.f32.partialorder %v1114, 0.0
    %vm1131 = vcmp.gt.f32.partialorder %v1115, 0.0
    %vm1132 = vcmp.gt.f32.partialorder %v1116, 0.0
    %vm1133 = vcmp.gt.f32.partialorder %v1117, 0.0
    %vm1134 = vcmp.gt.f32.partialorder %v1118, 0.0
    %vm1135 = vcmp.gt.f32.partialorder %v1119, 0.0
    %vm1136 = vcmp.gt.f32.partialorder %v1120, 0.0
    %vm1137 = vcmp.gt.f32.partialorder %v1121, 0.0
    %vm1138 = vcmp.gt.f32.partialorder %v1122, 0.0
    %vm1139 = vcmp.gt.f32.partialorder %v1123, 0.0
    %vm1140 = vcmp.gt.f32.partialorder %v1124, 0.0
    %v1141 = vmul.f32 %v1109, 1.442695
    %v1142 = vpow.pop %v1141
    %v1143 = vmul.f32 %v1110, 1.442695
    %v1144 = vpow.pop %v1143
    %v1145 = vmul.f32 %v1111, 1.442695
    %v1146 = vpow.pop %v1145
    %v1147 = vmul.f32 %v1112, 1.442695
    %v1148 = vpow.pop %v1147
    %v1149 = vmul.f32 %v1113, 1.442695
    %v1150 = vpow.pop %v1149
    %v1151 = vmul.f32 %v1114, 1.442695
    %v1152 = vpow.pop %v1151
    %v1153 = vmul.f32 %v1115, 1.442695
    %v1154 = vpow.pop %v1153
    %v1155 = vmul.f32 %v1116, 1.442695
    %v1156 = vpow.pop %v1155
    %v1157 = vmul.f32 %v1117, 1.442695
    %v1158 = vpow.pop %v1157
    %v1159 = vmul.f32 %v1118, 1.442695
    %v1160 = vpow.pop %v1159
    %v1161 = vmul.f32 %v1119, 1.442695
    %v1162 = vpow.pop %v1161
    %v1163 = vmul.f32 %v1120, 1.442695
    %v1164 = vpow.pop %v1163
    %v1165 = vmul.f32 %v1121, 1.442695
    %v1166 = vpow.pop %v1165
    %v1167 = vmul.f32 %v1122, 1.442695
    %v1168 = vpow.pop %v1167
    %v1169 = vmul.f32 %v1123, 1.442695
    %v1170 = vpow.pop %v1169
    %v1171 = vmul.f32 %v1124, 1.442695
    %v1172 = vpow.pop %v1171
    %v1173 = vsub.f32 %v1142, 1.0
    %v1174 = vsub.f32 %v1144, 1.0
    %v1175 = vsub.f32 %v1146, 1.0
    %v1176 = vsub.f32 %v1148, 1.0
    %v1177 = vsub.f32 %v1150, 1.0
    %v1178 = vsub.f32 %v1152, 1.0
    %v1179 = vsub.f32 %v1154, 1.0
    %v1180 = vsub.f32 %v1156, 1.0
    %v1181 = vsub.f32 %v1158, 1.0
    %v1182 = vsub.f32 %v1160, 1.0
    %v1183 = vsub.f32 %v1162, 1.0
    %v1184 = vsub.f32 %v1164, 1.0
    %v1185 = vsub.f32 %v1166, 1.0
    %v1186 = vsub.f32 %v1168, 1.0
    %v1187 = vsub.f32 %v1170, 1.0
    %v1188 = vsub.f32 %v1172, 1.0
    %v1189 = vsel %vm1125, %v1109, %v1173
    %v1190 = vsel %vm1126, %v1110, %v1174
    %v1191 = vsel %vm1127, %v1111, %v1175
    %v1192 = vsel %vm1128, %v1112, %v1176
    %v1193 = vsel %vm1129, %v1113, %v1177
    %v1194 = vsel %vm1130, %v1114, %v1178
    %v1195 = vsel %vm1131, %v1115, %v1179
    %v1196 = vsel %vm1132, %v1116, %v1180
    %v1197 = vsel %vm1133, %v1117, %v1181
    %v1198 = vsel %vm1134, %v1118, %v1182
    %v1199 = vsel %vm1135, %v1119, %v1183
    %v1200 = vsel %vm1136, %v1120, %v1184
    %v1201 = vsel %vm1137, %v1121, %v1185
    %v1202 = vsel %vm1138, %v1122, %v1186
    %v1203 = vsel %vm1139, %v1123, %v1187
    %v1204 = vsel %vm1140, %v1124, %v1188
    %v1205 = vpack.c.bf16 %v1190, %v1189
    %v1206 = vpack.c.bf16 %v1192, %v1191
    %v1207 = vpack.c.bf16 %v1194, %v1193
    %v1208 = vpack.c.bf16 %v1196, %v1195
    %v1209 = vpack.c.bf16 %v1198, %v1197
    %v1210 = vpack.c.bf16 %v1200, %v1199
    %v1211 = vpack.c.bf16 %v1202, %v1201
    %v1212 = vpack.c.bf16 %v1204, %v1203
    %v1221 = vunpack.c.l.b16 %v1205
    %v1222 = vunpack.c.h.b16 %v1205
    %v1223 = vunpack.c.l.b16 %v1206
    %v1224 = vunpack.c.h.b16 %v1206
    %v1225 = vunpack.c.l.b16 %v1207
    %v1226 = vunpack.c.h.b16 %v1207
    %v1227 = vunpack.c.l.b16 %v1208
    %v1228 = vunpack.c.h.b16 %v1208
    %v1229 = vunpack.c.l.b16 %v1209
    %v1230 = vunpack.c.h.b16 %v1209
    %v1231 = vunpack.c.l.b16 %v1210
    %v1232 = vunpack.c.h.b16 %v1210
    %v1233 = vunpack.c.l.b16 %v1211
    %v1234 = vunpack.c.h.b16 %v1211
    %v1235 = vunpack.c.l.b16 %v1212
    %v1236 = vunpack.c.h.b16 %v1212
    %v1237 = vpack.c.b16 %v1221, %v1221
    %v1238 = vpack.c.b16 %v1222, %v1222
    %v1239 = vpack.c.b16 %v1223, %v1223
    %v1240 = vpack.c.b16 %v1224, %v1224
    %v1241 = vpack.c.b16 %v1225, %v1225
    %v1242 = vpack.c.b16 %v1226, %v1226
    %v1243 = vpack.c.b16 %v1227, %v1227
    %v1244 = vpack.c.b16 %v1228, %v1228
    %v1245 = vpack.c.b16 %v1229, %v1229
    %v1246 = vpack.c.b16 %v1230, %v1230
    %v1247 = vpack.c.b16 %v1231, %v1231
    %v1248 = vpack.c.b16 %v1232, %v1232
    %v1249 = vpack.c.b16 %v1233, %v1233
    %v1250 = vpack.c.b16 %v1234, %v1234
    %v1251 = vpack.c.b16 %v1235, %v1235
    %v1252 = vpack.c.b16 %v1236, %v1236
    %1269 = vst [vmem:[#allocation10] sm:$0xf] %v1237
    %1270 = vst [vmem:[#allocation10 + $0x4] sm:$0xf] %v1238
    %1271 = vst [vmem:[#allocation10 + $0x8] sm:$0xf] %v1239
    %1272 = vst [vmem:[#allocation10 + $0xc] sm:$0xf] %v1240
    %1273 = vst [vmem:[#allocation10 + $0x10] sm:$0xf] %v1241
    %1274 = vst [vmem:[#allocation10 + $0x14] sm:$0xf] %v1242
    %1275 = vst [vmem:[#allocation10 + $0x18] sm:$0xf] %v1243
    %1276 = vst [vmem:[#allocation10 + $0x1c] sm:$0xf] %v1244
    %1277 = vst [vmem:[#allocation10 + $0x20] sm:$0xf] %v1245
    %1278 = vst [vmem:[#allocation10 + $0x24] sm:$0xf] %v1246
    %1279 = vst [vmem:[#allocation10 + $0x28] sm:$0xf] %v1247
    %1280 = vst [vmem:[#allocation10 + $0x2c] sm:$0xf] %v1248
    %1281 = vst [vmem:[#allocation10 + $0x30] sm:$0xf] %v1249
    %1282 = vst [vmem:[#allocation10 + $0x34] sm:$0xf] %v1250
    %1283 = vst [vmem:[#allocation10 + $0x38] sm:$0xf] %v1251
    %1284 = vst [vmem:[#allocation10 + $0x3c] sm:$0xf] %v1252
    // Predicated region
    $region38: #{tpu_custom_call.1} parent=1 // pred_check
      _
    $region39: #{tpu_custom_call.1} parent=1 // pred_check_branch
      %1286 = sbr.rel (0) target = $region41
    $region40: #{tpu_custom_call.1} parent=1 // pred_region
      %s1288 = ssub.s32 1024, 1024
      %1289 = vsyncadd [#allocation4], %s1288
      %s1290 = sshll.u32 [#allocation10], 4
      %s1291 = int_to_ptr.vmem [resolvable:$true] %s1290
      %1296 = dma.vmem_to_hbm [thread:$0]  %s1291, 1024, %s5, [#allocation4], 64, 64, 4
    $region41: #{tpu_custom_call.1} parent=1 // pred_fallthru
      _
    // Predicated region
    $region42: #{tpu_custom_call.1} parent=1 // pred_check
      _
    $region43: #{tpu_custom_call.1} parent=1 // pred_check_branch
      %1298 = sbr.rel (0) target = $region45
    $region44: #{tpu_custom_call.1} parent=1 // pred_region
      %1299 = dma.done [#allocation4], 1024
    $region45: #{tpu_custom_call.1} parent=1 // pred_fallthru
      _
    %1300 = vsyncpa [#allocation3], 1
    %1301 = vsyncpa [#allocation6], 1
    %1302 = vsyncpa [#allocation9], 1
    %1303 = vsyncpa [#allocation4], 1

// kernel: tpu_custom_call.1
$region0: #{tpu_custom_call.1}
  #allocation0 [shape = 'u32[]', space=smem, size = 0x4, offset = 0x4, fixed_abs, tag = 'smem constant byte address 0x4 - core index']
  #allocation1 [shape = 'u32[144,128]{1,0:T(1,128)}', space=vmem, size = 0x12000, scoped, tag = 'internal scratch']
  %s0 = inlined_call_operand.hbm [shape: f32[128,128], index: 0, kind: input, shape index: {}]
  %s1 = inlined_call_operand.hbm [shape: f32[8,128], index: 1, kind: input, shape index: {}]
  %s2 = inlined_call_operand.hbm [shape: bf16[128,128], index: 2, kind: input, shape index: {}]
  %s3 = inlined_call_operand.hbm [shape: bf16[128,128], index: 3, kind: input, shape index: {}]
  %s4 = inlined_call_operand.vmem [shape: f32[1,128], index: 4, kind: input, shape index: {}]
  %s5 = inlined_call_operand.hbm [shape: bf16[128,128], index: 5, kind: output, shape index: {}]
  %s6 = sld [smem:[#allocation0]]
  $region46: #{tpu_custom_call.1} parent=0
    _
  %s8 = ssub.s32 1, %s6
  %s9 = scalar_select 0, %s8, %s6
  $region1: #{tpu_custom_call.1} parent=0
    #allocation2 [shape = 'u8[65536]{0}', space=vmem, size = 0x10000, scoped, tag = 'input window, operand 0, single buffered']
    #allocation3 [shape = 's32[1]{0}', space=sflag, size = 0x4, scoped, tag = 'scoped memory for tpu_custom_call.1']
    #allocation4 [shape = 's32[1]{0}', space=sflag, size = 0x4, scoped, tag = 'scoped memory for tpu_custom_call.1']
    #allocation5 [shape = 'u8[4096]{0}', space=vmem, size = 0x1000, scoped, tag = 'input window, operand 1, single buffered']
    #allocation6 [shape = 's32[1]{0}', space=sflag, size = 0x4, scoped, tag = 'scoped memory for tpu_custom_call.1']
    #allocation7 [shape = 'u8[32768]{0}', space=vmem, size = 0x8000, scoped, tag = 'input window, operand 2, single buffered']
    #allocation8 [shape = 'u8[32768]{0}', space=vmem, size = 0x8000, scoped, tag = 'input window, operand 3, single buffered']
    #allocation9 [shape = 's32[1]{0}', space=sflag, size = 0x4, scoped, tag = 'scoped memory for tpu_custom_call.1']
    #allocation10 [shape = 'u8[32768]{0}', space=vmem, size = 0x8000, scoped, tag = 'output window, operand 0, single buffered']
    %10 = vsyncpa [#allocation3], 0
    %11 = vsyncpa [#allocation6], 0
    %12 = vsyncpa [#allocation9], 0
    %13 = vsyncpa [#allocation4], 0
    // Predicated region
    $region2: #{tpu_custom_call.1} parent=1 // pred_check
      _
    $region3: #{tpu_custom_call.1} parent=1 // pred_check_branch
      %15 = sbr.rel (0) target = $region5
    $region4: #{tpu_custom_call.1} parent=1 // pred_region
      %s17 = ssub.s32 2048, 2048
      %18 = vsyncadd [#allocation3], %s17
      %s19 = sshll.u32 [#allocation2], 4
      %s20 = int_to_ptr.vmem [resolvable:$true] %s19
      %25 = dma.hbm_to_vmem [thread:$0]  %s0, 2048, %s20, [#allocation3], 128, 128, 8
    $region5: #{tpu_custom_call.1} parent=1 // pred_fallthru
      _
    // Predicated region
    $region6: #{tpu_custom_call.1} parent=1 // pred_check
      _
    $region7: #{tpu_custom_call.1} parent=1 // pred_check_branch
      %27 = sbr.rel (0) target = $region9
    $region8: #{tpu_custom_call.1} parent=1 // pred_region
      %s29 = ssub.s32 128, 128
      %30 = vsyncadd [#allocation6], %s29
      %s32 = sshll.u32 [#allocation5], 4
      %s33 = int_to_ptr.vmem [resolvable:$true] %s32
      %35 = dma.hbm_to_vmem [thread:$0]  %s1, 128, %s33, [#allocation6]
    $region9: #{tpu_custom_call.1} parent=1 // pred_fallthru
      _
    // Predicated region
    $region10: #{tpu_custom_call.1} parent=1 // pred_check
      _
    $region11: #{tpu_custom_call.1} parent=1 // pred_check_branch
      %37 = sbr.rel (0) target = $region13
    $region12: #{tpu_custom_call.1} parent=1 // pred_region
      %s39 = ssub.s32 1024, 1024
      %40 = vsyncadd [#allocation6], %s39
      %s41 = sshll.u32 [#allocation7], 4
      %s42 = int_to_ptr.vmem [resolvable:$true] %s41
      %47 = dma.hbm_to_vmem [thread:$0]  %s2, 1024, %s42, [#allocation6], 64, 64, 4
    $region13: #{tpu_custom_call.1} parent=1 // pred_fallthru
      _
    // Predicated region
    $region14: #{tpu_custom_call.1} parent=1 // pred_check
      _
    $region15: #{tpu_custom_call.1} parent=1 // pred_check_branch
      %49 = sbr.rel (0) target = $region17
    $region16: #{tpu_custom_call.1} parent=1 // pred_region
      %s51 = ssub.s32 1024, 1024
      %52 = vsyncadd [#allocation9], %s51
      %s53 = sshll.u32 [#allocation8], 4
      %s54 = int_to_ptr.vmem [resolvable:$true] %s53
      %59 = dma.hbm_to_vmem [thread:$0]  %s3, 1024, %s54, [#allocation9], 64, 64, 4
    $region17: #{tpu_custom_call.1} parent=1 // pred_fallthru
      _
    // Predicated region
    $region18: #{tpu_custom_call.1} parent=1 // pred_check
      _
    $region19: #{tpu_custom_call.1} parent=1 // pred_check_branch
      %61 = sbr.rel (0) target = $region21
    $region20: #{tpu_custom_call.1} parent=1 // pred_region
      _
    $region21: #{tpu_custom_call.1} parent=1 // pred_fallthru
      _
    // Predicated region
    $region22: #{tpu_custom_call.1} parent=1 // pred_check
      _
    $region23: #{tpu_custom_call.1} parent=1 // pred_check_branch
      %63 = sbr.rel (0) target = $region25
    $region24: #{tpu_custom_call.1} parent=1 // pred_region
      %64 = dma.done [#allocation3], 2048
    $region25: #{tpu_custom_call.1} parent=1 // pred_fallthru
      _
    // Predicated region
    $region26: #{tpu_custom_call.1} parent=1 // pred_check
      _
    $region27: #{tpu_custom_call.1} parent=1 // pred_check_branch
      %66 = sbr.rel (0) target = $region29
    $region28: #{tpu_custom_call.1} parent=1 // pred_region
      %67 = dma.done [#allocation6], 128
    $region29: #{tpu_custom_call.1} parent=1 // pred_fallthru
      _
    // Predicated region
    $region30: #{tpu_custom_call.1} parent=1 // pred_check
      _
    $region31: #{tpu_custom_call.1} parent=1 // pred_check_branch
      %69 = sbr.rel (0) target = $region33
    $region32: #{tpu_custom_call.1} parent=1 // pred_region
      %70 = dma.done [#allocation6], 1024
    $region33: #{tpu_custom_call.1} parent=1 // pred_fallthru
      _
    // Predicated region
    $region34: #{tpu_custom_call.1} parent=1 // pred_check
      _
    $region35: #{tpu_custom_call.1} parent=1 // pred_check_branch
      %72 = sbr.rel (0) target = $region37
    $region36: #{tpu_custom_call.1} parent=1 // pred_region
      %73 = dma.done [#allocation9], 1024
    $region37: #{tpu_custom_call.1} parent=1 // pred_fallthru
      _
    %v75 = vld [vmem:[#allocation7] sm:$0xf]
    %v76 = vld [vmem:[#allocation7 + $0x4] sm:$0xf]
    %v77 = vld [vmem:[#allocation7 + $0x8] sm:$0xf]
    %v78 = vld [vmem:[#allocation7 + $0xc] sm:$0xf]
    %v79 = vld [vmem:[#allocation7 + $0x10] sm:$0xf]
    %v80 = vld [vmem:[#allocation7 + $0x14] sm:$0xf]
    %v81 = vld [vmem:[#allocation7 + $0x18] sm:$0xf]
    %v82 = vld [vmem:[#allocation7 + $0x1c] sm:$0xf]
    %v83 = vld [vmem:[#allocation7 + $0x20] sm:$0xf]
    %v84 = vld [vmem:[#allocation7 + $0x24] sm:$0xf]
    %v85 = vld [vmem:[#allocation7 + $0x28] sm:$0xf]
    %v86 = vld [vmem:[#allocation7 + $0x2c] sm:$0xf]
    %v87 = vld [vmem:[#allocation7 + $0x30] sm:$0xf]
    %v88 = vld [vmem:[#allocation7 + $0x34] sm:$0xf]
    %v89 = vld [vmem:[#allocation7 + $0x38] sm:$0xf]
    %v90 = vld [vmem:[#allocation7 + $0x3c] sm:$0xf]
    %v91 = vunpack.c.l.bf16 %v75
    %v92 = vunpack.c.l.bf16 %v76
    %v93 = vunpack.c.l.bf16 %v77
    %v94 = vunpack.c.l.bf16 %v78
    %v95 = vunpack.c.l.bf16 %v79
    %v96 = vunpack.c.l.bf16 %v80
    %v97 = vunpack.c.l.bf16 %v81
    %v98 = vunpack.c.l.bf16 %v82
    %v99 = vunpack.c.l.bf16 %v83
    %v100 = vunpack.c.l.bf16 %v84
    %v101 = vunpack.c.l.bf16 %v85
    %v102 = vunpack.c.l.bf16 %v86
    %v103 = vunpack.c.l.bf16 %v87
    %v104 = vunpack.c.l.bf16 %v88
    %v105 = vunpack.c.l.bf16 %v89
    %v106 = vunpack.c.l.bf16 %v90
    %v107 = vld [vmem:[#allocation2] sm:$0xff]
    %v108 = vld [vmem:[#allocation2 + $0x8] sm:$0xff]
    %v109 = vld [vmem:[#allocation2 + $0x10] sm:$0xff]
    %v110 = vld [vmem:[#allocation2 + $0x18] sm:$0xff]
    %v111 = vld [vmem:[#allocation2 + $0x20] sm:$0xff]
    %v112 = vld [vmem:[#allocation2 + $0x28] sm:$0xff]
    %v113 = vld [vmem:[#allocation2 + $0x30] sm:$0xff]
    %v114 = vld [vmem:[#allocation2 + $0x38] sm:$0xff]
    %v115 = vld [vmem:[#allocation2 + $0x40] sm:$0xff]
    %v116 = vld [vmem:[#allocation2 + $0x48] sm:$0xff]
    %v117 = vld [vmem:[#allocation2 + $0x50] sm:$0xff]
    %v118 = vld [vmem:[#allocation2 + $0x58] sm:$0xff]
    %v119 = vld [vmem:[#allocation2 + $0x60] sm:$0xff]
    %v120 = vld [vmem:[#allocation2 + $0x68] sm:$0xff]
    %v121 = vld [vmem:[#allocation2 + $0x70] sm:$0xff]
    %v122 = vld [vmem:[#allocation2 + $0x78] sm:$0xff]
    %v123 = vld [vmem:[#allocation5] sm:$0xff]
    %v124 = vld [vmem:[#allocation8] sm:$0xf]
    %v125 = vld [vmem:[#allocation8 + $0x4] sm:$0xf]
    %v126 = vld [vmem:[#allocation8 + $0x8] sm:$0xf]
    %v127 = vld [vmem:[#allocation8 + $0xc] sm:$0xf]
    %v128 = vld [vmem:[#allocation8 + $0x10] sm:$0xf]
    %v129 = vld [vmem:[#allocation8 + $0x14] sm:$0xf]
    %v130 = vld [vmem:[#allocation8 + $0x18] sm:$0xf]
    %v131 = vld [vmem:[#allocation8 + $0x1c] sm:$0xf]
    %v132 = vld [vmem:[#allocation8 + $0x20] sm:$0xf]
    %v133 = vld [vmem:[#allocation8 + $0x24] sm:$0xf]
    %v134 = vld [vmem:[#allocation8 + $0x28] sm:$0xf]
    %v135 = vld [vmem:[#allocation8 + $0x2c] sm:$0xf]
    %v136 = vld [vmem:[#allocation8 + $0x30] sm:$0xf]
    %v137 = vld [vmem:[#allocation8 + $0x34] sm:$0xf]
    %v138 = vld [vmem:[#allocation8 + $0x38] sm:$0xf]
    %v139 = vld [vmem:[#allocation8 + $0x3c] sm:$0xf]
    %v140 = vld [vmem:[%s4] sm:$0x1]
    %v141 = vlaneseq
    %v142 = vand.u32 %v141, 127
    %144 = vset.pattern.permute.xlu0 0
    %145 = vperm.xlu0 %144, %v107
    %v146 = vpop.permute.xlu0 %145
    %149 = vset.pattern.permute.xlu0 0
    %150 = vperm.xlu0 %149, %v108
    %v151 = vpop.permute.xlu0 %150
    %154 = vset.pattern.permute.xlu0 0
    %155 = vperm.xlu0 %154, %v109
    %v156 = vpop.permute.xlu0 %155
    %159 = vset.pattern.permute.xlu0 0
    %160 = vperm.xlu0 %159, %v110
    %v161 = vpop.permute.xlu0 %160
    %164 = vset.pattern.permute.xlu0 0
    %165 = vperm.xlu0 %164, %v111
    %v166 = vpop.permute.xlu0 %165
    %169 = vset.pattern.permute.xlu0 0
    %170 = vperm.xlu0 %169, %v112
    %v171 = vpop.permute.xlu0 %170
    %174 = vset.pattern.permute.xlu0 0
    %175 = vperm.xlu0 %174, %v113
    %v176 = vpop.permute.xlu0 %175
    %179 = vset.pattern.permute.xlu0 0
    %180 = vperm.xlu0 %179, %v114
    %v181 = vpop.permute.xlu0 %180
    %184 = vset.pattern.permute.xlu0 0
    %185 = vperm.xlu0 %184, %v115
    %v186 = vpop.permute.xlu0 %185
    %189 = vset.pattern.permute.xlu0 0
    %190 = vperm.xlu0 %189, %v116
    %v191 = vpop.permute.xlu0 %190
    %194 = vset.pattern.permute.xlu0 0
    %195 = vperm.xlu0 %194, %v117
    %v196 = vpop.permute.xlu0 %195
    %199 = vset.pattern.permute.xlu0 0
    %200 = vperm.xlu0 %199, %v118
    %v201 = vpop.permute.xlu0 %200
    %204 = vset.pattern.permute.xlu0 0
    %205 = vperm.xlu0 %204, %v119
    %v206 = vpop.permute.xlu0 %205
    %209 = vset.pattern.permute.xlu0 0
    %210 = vperm.xlu0 %209, %v120
    %v211 = vpop.permute.xlu0 %210
    %214 = vset.pattern.permute.xlu0 0
    %215 = vperm.xlu0 %214, %v121
    %v216 = vpop.permute.xlu0 %215
    %219 = vset.pattern.permute.xlu0 0
    %220 = vperm.xlu0 %219, %v122
    %v221 = vpop.permute.xlu0 %220
    %v223 = vlaneseq
    %v224 = vshrl.u32 %v223, 7
    %v225 = vsub.s32 0, %v224
    %v226 = vrot.slane %v123, %v225
    %v227 = vadd.f32 %v146, %v226
    %v228 = vadd.f32 %v151, %v226
    %v229 = vadd.f32 %v156, %v226
    %v230 = vadd.f32 %v161, %v226
    %v231 = vadd.f32 %v166, %v226
    %v232 = vadd.f32 %v171, %v226
    %v233 = vadd.f32 %v176, %v226
    %v234 = vadd.f32 %v181, %v226
    %v235 = vadd.f32 %v186, %v226
    %v236 = vadd.f32 %v191, %v226
    %v237 = vadd.f32 %v196, %v226
    %v238 = vadd.f32 %v201, %v226
    %v239 = vadd.f32 %v206, %v226
    %v240 = vadd.f32 %v211, %v226
    %v241 = vadd.f32 %v216, %v226
    %v242 = vadd.f32 %v221, %v226
    %v243 = vmul.f32 %v227, 0.2
    %v244 = vmul.f32 %v228, 0.2
    %v245 = vmul.f32 %v229, 0.2
    %v246 = vmul.f32 %v230, 0.2
    %v247 = vmul.f32 %v231, 0.2
    %v248 = vmul.f32 %v232, 0.2
    %v249 = vmul.f32 %v233, 0.2
    %v250 = vmul.f32 %v234, 0.2
    %v251 = vmul.f32 %v235, 0.2
    %v252 = vmul.f32 %v236, 0.2
    %v253 = vmul.f32 %v237, 0.2
    %v254 = vmul.f32 %v238, 0.2
    %v255 = vmul.f32 %v239, 0.2
    %v256 = vmul.f32 %v240, 0.2
    %v257 = vmul.f32 %v241, 0.2
    %v258 = vmul.f32 %v242, 0.2
    %v259 = vmax.f32 %v227, %v243
    %v260 = vmax.f32 %v228, %v244
    %v261 = vmax.f32 %v229, %v245
    %v262 = vmax.f32 %v230, %v246
    %v263 = vmax.f32 %v231, %v247
    %v264 = vmax.f32 %v232, %v248
    %v265 = vmax.f32 %v233, %v249
    %v266 = vmax.f32 %v234, %v250
    %v267 = vmax.f32 %v235, %v251
    %v268 = vmax.f32 %v236, %v252
    %v269 = vmax.f32 %v237, %v253
    %v270 = vmax.f32 %v238, %v254
    %v271 = vmax.f32 %v239, %v255
    %v272 = vmax.f32 %v240, %v256
    %v273 = vmax.f32 %v241, %v257
    %v274 = vmax.f32 %v242, %v258
    %v275 = vadd.f32 %v259, %v91
    %v276 = vadd.f32 %v260, %v92
    %v277 = vadd.f32 %v261, %v93
    %v278 = vadd.f32 %v262, %v94
    %v279 = vadd.f32 %v263, %v95
    %v280 = vadd.f32 %v264, %v96
    %v281 = vadd.f32 %v265, %v97
    %v282 = vadd.f32 %v266, %v98
    %v283 = vadd.f32 %v267, %v99
    %v284 = vadd.f32 %v268, %v100
    %v285 = vadd.f32 %v269, %v101
    %v286 = vadd.f32 %v270, %v102
    %v287 = vadd.f32 %v271, %v103
    %v288 = vadd.f32 %v272, %v104
    %v289 = vadd.f32 %v273, %v105
    %v290 = vadd.f32 %v274, %v106
    %291 = vmax.xlane.f32.xlu0 %v275
    %v292 = vpop.xlane.xlu0 %291
    %293 = vmax.xlane.f32.xlu0 %v276
    %v294 = vpop.xlane.xlu0 %293
    %295 = vmax.xlane.f32.xlu0 %v277
    %v296 = vpop.xlane.xlu0 %295
    %297 = vmax.xlane.f32.xlu0 %v278
    %v298 = vpop.xlane.xlu0 %297
    %299 = vmax.xlane.f32.xlu0 %v279
    %v300 = vpop.xlane.xlu0 %299
    %301 = vmax.xlane.f32.xlu0 %v280
    %v302 = vpop.xlane.xlu0 %301
    %303 = vmax.xlane.f32.xlu0 %v281
    %v304 = vpop.xlane.xlu0 %303
    %305 = vmax.xlane.f32.xlu0 %v282
    %v306 = vpop.xlane.xlu0 %305
    %307 = vmax.xlane.f32.xlu0 %v283
    %v308 = vpop.xlane.xlu0 %307
    %309 = vmax.xlane.f32.xlu0 %v284
    %v310 = vpop.xlane.xlu0 %309
    %311 = vmax.xlane.f32.xlu0 %v285
    %v312 = vpop.xlane.xlu0 %311
    %313 = vmax.xlane.f32.xlu0 %v286
    %v314 = vpop.xlane.xlu0 %313
    %315 = vmax.xlane.f32.xlu0 %v287
    %v316 = vpop.xlane.xlu0 %315
    %317 = vmax.xlane.f32.xlu0 %v288
    %v318 = vpop.xlane.xlu0 %317
    %319 = vmax.xlane.f32.xlu0 %v289
    %v320 = vpop.xlane.xlu0 %319
    %321 = vmax.xlane.f32.xlu0 %v290
    %v322 = vpop.xlane.xlu0 %321
    %v323 = vsub.f32 %v275, %v292
    %v324 = vsub.f32 %v276, %v294
    %v325 = vsub.f32 %v277, %v296
    %v326 = vsub.f32 %v278, %v298
    %v327 = vsub.f32 %v279, %v300
    %v328 = vsub.f32 %v280, %v302
    %v329 = vsub.f32 %v281, %v304
    %v330 = vsub.f32 %v282, %v306
    %v331 = vsub.f32 %v283, %v308
    %v332 = vsub.f32 %v284, %v310
    %v333 = vsub.f32 %v285, %v312
    %v334 = vsub.f32 %v286, %v314
    %v335 = vsub.f32 %v287, %v316
    %v336 = vsub.f32 %v288, %v318
    %v337 = vsub.f32 %v289, %v320
    %v338 = vsub.f32 %v290, %v322
    %v339 = vmul.f32 %v323, 1.442695
    %v340 = vpow.pop %v339
    %v341 = vmul.f32 %v324, 1.442695
    %v342 = vpow.pop %v341
    %v343 = vmul.f32 %v325, 1.442695
    %v344 = vpow.pop %v343
    %v345 = vmul.f32 %v326, 1.442695
    %v346 = vpow.pop %v345
    %v347 = vmul.f32 %v327, 1.442695
    %v348 = vpow.pop %v347
    %v349 = vmul.f32 %v328, 1.442695
    %v350 = vpow.pop %v349
    %v351 = vmul.f32 %v329, 1.442695
    %v352 = vpow.pop %v351
    %v353 = vmul.f32 %v330, 1.442695
    %v354 = vpow.pop %v353
    %v355 = vmul.f32 %v331, 1.442695
    %v356 = vpow.pop %v355
    %v357 = vmul.f32 %v332, 1.442695
    %v358 = vpow.pop %v357
    %v359 = vmul.f32 %v333, 1.442695
    %v360 = vpow.pop %v359
    %v361 = vmul.f32 %v334, 1.442695
    %v362 = vpow.pop %v361
    %v363 = vmul.f32 %v335, 1.442695
    %v364 = vpow.pop %v363
    %v365 = vmul.f32 %v336, 1.442695
    %v366 = vpow.pop %v365
    %v367 = vmul.f32 %v337, 1.442695
    %v368 = vpow.pop %v367
    %v369 = vmul.f32 %v338, 1.442695
    %v370 = vpow.pop %v369
    %v371 = vpack.c.bf16 %v342, %v340
    %v372 = vpack.c.bf16 %v346, %v344
    %v373 = vpack.c.bf16 %v350, %v348
    %v374 = vpack.c.bf16 %v354, %v352
    %v375 = vpack.c.bf16 %v358, %v356
    %v376 = vpack.c.bf16 %v362, %v360
    %v377 = vpack.c.bf16 %v366, %v364
    %v378 = vpack.c.bf16 %v370, %v368
    %v395 = vunpack.c.l.b16 %v124
    %v396 = vunpack.c.l.b16 %v125
    %v397 = vunpack.c.l.b16 %v126
    %v398 = vunpack.c.l.b16 %v127
    %v399 = vunpack.c.l.b16 %v128
    %v400 = vunpack.c.l.b16 %v129
    %v401 = vunpack.c.l.b16 %v130
    %v402 = vunpack.c.l.b16 %v131
    %v403 = vunpack.c.l.b16 %v132
    %v404 = vunpack.c.l.b16 %v133
    %v405 = vunpack.c.l.b16 %v134
    %v406 = vunpack.c.l.b16 %v135
    %v407 = vunpack.c.l.b16 %v136
    %v408 = vunpack.c.l.b16 %v137
    %v409 = vunpack.c.l.b16 %v138
    %v410 = vunpack.c.l.b16 %v139
    %v411 = vpack.c.b16 %v396, %v395
    %v412 = vpack.c.b16 %v398, %v397
    %v413 = vpack.c.b16 %v400, %v399
    %v414 = vpack.c.b16 %v402, %v401
    %v415 = vpack.c.b16 %v404, %v403
    %v416 = vpack.c.b16 %v406, %v405
    %v417 = vpack.c.b16 %v408, %v407
    %v418 = vpack.c.b16 %v410, %v409
    %427 = vmatprep.subr.bf16.mxu0 0
    %428 = vmatpush1.bf16.msra.mxu0 %v411
    %429 = vmatprep.subr.bf16.mxu0 0
    %430 = vmatpush1.bf16.msra.mxu0 %v412
    %431 = vmatprep.subr.bf16.mxu0 0
    %432 = vmatpush1.bf16.msra.mxu0 %v413
    %433 = vmatprep.subr.bf16.mxu0 0
    %434 = vmatpush1.bf16.msra.mxu0 %v414
    %435 = vmatprep.subr.bf16.mxu0 0
    %436 = vmatpush1.bf16.msra.mxu0 %v415
    %437 = vmatprep.subr.bf16.mxu0 0
    %438 = vmatpush1.bf16.msra.mxu0 %v416
    %439 = vmatprep.subr.bf16.mxu0 0
    %440 = vmatpush1.bf16.msra.mxu0 %v417
    %441 = vmatprep.subr.bf16.mxu0 0
    %442 = vmatpush1.bf16.msra.mxu0 %v418
    %443 = vmatprep.subr.bf16.mxu0 0
    %444 = vmatpush1.bf16.msra.mxu0 0
    %445 = vmatprep.subr.bf16.mxu0 0
    %446 = vmatpush1.bf16.msra.mxu0 0
    %447 = vmatprep.subr.bf16.mxu0 0
    %448 = vmatpush1.bf16.msra.mxu0 0
    %449 = vmatprep.subr.bf16.mxu0 0
    %450 = vmatpush1.bf16.msra.mxu0 0
    %451 = vmatprep.subr.bf16.mxu0 0
    %452 = vmatpush1.bf16.msra.mxu0 0
    %453 = vmatprep.subr.bf16.mxu0 0
    %454 = vmatpush1.bf16.msra.mxu0 0
    %455 = vmatprep.subr.bf16.mxu0 0
    %456 = vmatpush1.bf16.msra.mxu0 0
    %457 = vmatprep.subr.bf16.mxu0 0
    %458 = vmatpush1.bf16.msra.mxu0 0
    %459 = vmatprep.mubr.bf16.mxu0 0
    %460 = vmatmul.mubr.bf16.gmra.mrb[0].mxu0 %v371
    %v461 = vpop.f32.mrb[0].mxu0
    %v462 = vadd.f32 0.0, %v461
    %v463 = vpop.f32.mrb[0].mxu0
    %v464 = vpop.f32.mrb[0].mxu0
    %v465 = vadd.f32 0.0, %v464
    %v466 = vpop.f32.mrb[0].mxu0
    %467 = vmatprep.mubr.bf16.mxu0 0
    %468 = vmatmul.mubr.bf16.gmra.mrb[0].mxu0 %v372
    %v469 = vpop.f32.mrb[0].mxu0
    %v470 = vadd.f32 0.0, %v469
    %v471 = vpop.f32.mrb[0].mxu0
    %v472 = vpop.f32.mrb[0].mxu0
    %v473 = vadd.f32 0.0, %v472
    %v474 = vpop.f32.mrb[0].mxu0
    %475 = vmatprep.mubr.bf16.mxu0 0
    %476 = vmatmul.mubr.bf16.gmra.mrb[0].mxu0 %v373
    %v477 = vpop.f32.mrb[0].mxu0
    %v478 = vadd.f32 0.0, %v477
    %v479 = vpop.f32.mrb[0].mxu0
    %v480 = vpop.f32.mrb[0].mxu0
    %v481 = vadd.f32 0.0, %v480
    %v482 = vpop.f32.mrb[0].mxu0
    %483 = vmatprep.mubr.bf16.mxu0 0
    %484 = vmatmul.mubr.bf16.gmra.mrb[0].mxu0 %v374
    %v485 = vpop.f32.mrb[0].mxu0
    %v486 = vadd.f32 0.0, %v485
    %v487 = vpop.f32.mrb[0].mxu0
    %v488 = vpop.f32.mrb[0].mxu0
    %v489 = vadd.f32 0.0, %v488
    %v490 = vpop.f32.mrb[0].mxu0
    %491 = vmatprep.mubr.bf16.mxu0 0
    %492 = vmatmul.mubr.bf16.gmra.mrb[0].mxu0 %v375
    %v493 = vpop.f32.mrb[0].mxu0
    %v494 = vadd.f32 0.0, %v493
    %v495 = vpop.f32.mrb[0].mxu0
    %v496 = vpop.f32.mrb[0].mxu0
    %v497 = vadd.f32 0.0, %v496
    %v498 = vpop.f32.mrb[0].mxu0
    %499 = vmatprep.mubr.bf16.mxu0 0
    %500 = vmatmul.mubr.bf16.gmra.mrb[0].mxu0 %v376
    %v501 = vpop.f32.mrb[0].mxu0
    %v502 = vadd.f32 0.0, %v501
    %v503 = vpop.f32.mrb[0].mxu0
    %v504 = vpop.f32.mrb[0].mxu0
    %v505 = vadd.f32 0.0, %v504
    %v506 = vpop.f32.mrb[0].mxu0
    %507 = vmatprep.mubr.bf16.mxu0 0
    %508 = vmatmul.mubr.bf16.gmra.mrb[0].mxu0 %v377
    %v509 = vpop.f32.mrb[0].mxu0
    %v510 = vadd.f32 0.0, %v509
    %v511 = vpop.f32.mrb[0].mxu0
    %v512 = vpop.f32.mrb[0].mxu0
    %v513 = vadd.f32 0.0, %v512
    %v514 = vpop.f32.mrb[0].mxu0
    %515 = vmatprep.mubr.bf16.mxu0 0
    %516 = vmatmul.mubr.bf16.gmra.mrb[0].mxu0 %v378
    %v517 = vpop.f32.mrb[0].mxu0
    %v518 = vadd.f32 0.0, %v517
    %v519 = vpop.f32.mrb[0].mxu0
    %v520 = vpop.f32.mrb[0].mxu0
    %v521 = vadd.f32 0.0, %v520
    %v522 = vpop.f32.mrb[0].mxu0
    %523 = vdwg.mxu0
    %v524 = vrcp.pop %v462
    %v525 = vrcp.pop %v465
    %v526 = vrcp.pop %v470
    %v527 = vrcp.pop %v473
    %v528 = vrcp.pop %v478
    %v529 = vrcp.pop %v481
    %v530 = vrcp.pop %v486
    %v531 = vrcp.pop %v489
    %v532 = vrcp.pop %v494
    %v533 = vrcp.pop %v497
    %v534 = vrcp.pop %v502
    %v535 = vrcp.pop %v505
    %v536 = vrcp.pop %v510
    %v537 = vrcp.pop %v513
    %v538 = vrcp.pop %v518
    %v539 = vrcp.pop %v521
    %541 = vset.pattern.permute.xlu0 64
    %542 = vperm.xlu0 %541, %v524
    %v543 = vpop.permute.xlu0 %542
    %546 = vset.pattern.permute.xlu0 64
    %547 = vperm.xlu0 %546, %v525
    %v548 = vpop.permute.xlu0 %547
    %551 = vset.pattern.permute.xlu0 64
    %552 = vperm.xlu0 %551, %v526
    %v553 = vpop.permute.xlu0 %552
    %556 = vset.pattern.permute.xlu0 64
    %557 = vperm.xlu0 %556, %v527
    %v558 = vpop.permute.xlu0 %557
    %561 = vset.pattern.permute.xlu0 64
    %562 = vperm.xlu0 %561, %v528
    %v563 = vpop.permute.xlu0 %562
    %566 = vset.pattern.permute.xlu0 64
    %567 = vperm.xlu0 %566, %v529
    %v568 = vpop.permute.xlu0 %567
    %571 = vset.pattern.permute.xlu0 64
    %572 = vperm.xlu0 %571, %v530
    %v573 = vpop.permute.xlu0 %572
    %576 = vset.pattern.permute.xlu0 64
    %577 = vperm.xlu0 %576, %v531
    %v578 = vpop.permute.xlu0 %577
    %581 = vset.pattern.permute.xlu0 64
    %582 = vperm.xlu0 %581, %v532
    %v583 = vpop.permute.xlu0 %582
    %586 = vset.pattern.permute.xlu0 64
    %587 = vperm.xlu0 %586, %v533
    %v588 = vpop.permute.xlu0 %587
    %591 = vset.pattern.permute.xlu0 64
    %592 = vperm.xlu0 %591, %v534
    %v593 = vpop.permute.xlu0 %592
    %596 = vset.pattern.permute.xlu0 64
    %597 = vperm.xlu0 %596, %v535
    %v598 = vpop.permute.xlu0 %597
    %601 = vset.pattern.permute.xlu0 64
    %602 = vperm.xlu0 %601, %v536
    %v603 = vpop.permute.xlu0 %602
    %606 = vset.pattern.permute.xlu0 64
    %607 = vperm.xlu0 %606, %v537
    %v608 = vpop.permute.xlu0 %607
    %611 = vset.pattern.permute.xlu0 64
    %612 = vperm.xlu0 %611, %v538
    %v613 = vpop.permute.xlu0 %612
    %616 = vset.pattern.permute.xlu0 64
    %617 = vperm.xlu0 %616, %v539
    %v618 = vpop.permute.xlu0 %617
    %v620 = vmul.f32 %v462, %v543
    %v621 = vmul.f32 %v465, %v548
    %v622 = vmul.f32 %v470, %v553
    %v623 = vmul.f32 %v473, %v558
    %v624 = vmul.f32 %v478, %v563
    %v625 = vmul.f32 %v481, %v568
    %v626 = vmul.f32 %v486, %v573
    %v627 = vmul.f32 %v489, %v578
    %v628 = vmul.f32 %v494, %v583
    %v629 = vmul.f32 %v497, %v588
    %v630 = vmul.f32 %v502, %v593
    %v631 = vmul.f32 %v505, %v598
    %v632 = vmul.f32 %v510, %v603
    %v633 = vmul.f32 %v513, %v608
    %v634 = vmul.f32 %v518, %v613
    %v635 = vmul.f32 %v521, %v618
    %vm636 = vcmp.ge.s32.totalorder %v142, 0
    %vm637 = vcmp.lt.s32.totalorder %v142, 32
    %vm638 = vmand %vm636, %vm637
    %v639 = vsel %vm638, %v620, 0.0
    %v640 = vsel %vm638, %v621, 0.0
    %v641 = vsel %vm638, %v622, 0.0
    %v642 = vsel %vm638, %v623, 0.0
    %v643 = vsel %vm638, %v624, 0.0
    %v644 = vsel %vm638, %v625, 0.0
    %v645 = vsel %vm638, %v626, 0.0
    %v646 = vsel %vm638, %v627, 0.0
    %v647 = vsel %vm638, %v628, 0.0
    %v648 = vsel %vm638, %v629, 0.0
    %v649 = vsel %vm638, %v630, 0.0
    %v650 = vsel %vm638, %v631, 0.0
    %v651 = vsel %vm638, %v632, 0.0
    %v652 = vsel %vm638, %v633, 0.0
    %v653 = vsel %vm638, %v634, 0.0
    %v654 = vsel %vm638, %v635, 0.0
    %655 = vset.pattern.permute.xlu0 1
    %656 = vperm.xlu0 %655, %v107
    %v657 = vpop.permute.xlu0 %656
    %659 = vset.pattern.permute.xlu0 1
    %660 = vperm.xlu0 %659, %v108
    %v661 = vpop.permute.xlu0 %660
    %663 = vset.pattern.permute.xlu0 1
    %664 = vperm.xlu0 %663, %v109
    %v665 = vpop.permute.xlu0 %664
    %667 = vset.pattern.permute.xlu0 1
    %668 = vperm.xlu0 %667, %v110
    %v669 = vpop.permute.xlu0 %668
    %671 = vset.pattern.permute.xlu0 1
    %672 = vperm.xlu0 %671, %v111
    %v673 = vpop.permute.xlu0 %672
    %675 = vset.pattern.permute.xlu0 1
    %676 = vperm.xlu0 %675, %v112
    %v677 = vpop.permute.xlu0 %676
    %679 = vset.pattern.permute.xlu0 1
    %680 = vperm.xlu0 %679, %v113
    %v681 = vpop.permute.xlu0 %680
    %683 = vset.pattern.permute.xlu0 1
    %684 = vperm.xlu0 %683, %v114
    %v685 = vpop.permute.xlu0 %684
    %687 = vset.pattern.permute.xlu0 1
    %688 = vperm.xlu0 %687, %v115
    %v689 = vpop.permute.xlu0 %688
    %691 = vset.pattern.permute.xlu0 1
    %692 = vperm.xlu0 %691, %v116
    %v693 = vpop.permute.xlu0 %692
    %695 = vset.pattern.permute.xlu0 1
    %696 = vperm.xlu0 %695, %v117
    %v697 = vpop.permute.xlu0 %696
    %699 = vset.pattern.permute.xlu0 1
    %700 = vperm.xlu0 %699, %v118
    %v701 = vpop.permute.xlu0 %700
    %703 = vset.pattern.permute.xlu0 1
    %704 = vperm.xlu0 %703, %v119
    %v705 = vpop.permute.xlu0 %704
    %707 = vset.pattern.permute.xlu0 1
    %708 = vperm.xlu0 %707, %v120
    %v709 = vpop.permute.xlu0 %708
    %711 = vset.pattern.permute.xlu0 1
    %712 = vperm.xlu0 %711, %v121
    %v713 = vpop.permute.xlu0 %712
    %715 = vset.pattern.permute.xlu0 1
    %716 = vperm.xlu0 %715, %v122
    %v717 = vpop.permute.xlu0 %716
    %v719 = vlaneseq
    %v720 = vshrl.u32 %v719, 7
    %v721 = vsub.s32 1, %v720
    %v722 = vrot.slane %v123, %v721
    %v723 = vadd.f32 %v657, %v722
    %v724 = vadd.f32 %v661, %v722
    %v725 = vadd.f32 %v665, %v722
    %v726 = vadd.f32 %v669, %v722
    %v727 = vadd.f32 %v673, %v722
    %v728 = vadd.f32 %v677, %v722
    %v729 = vadd.f32 %v681, %v722
    %v730 = vadd.f32 %v685, %v722
    %v731 = vadd.f32 %v689, %v722
    %v732 = vadd.f32 %v693, %v722
    %v733 = vadd.f32 %v697, %v722
    %v734 = vadd.f32 %v701, %v722
    %v735 = vadd.f32 %v705, %v722
    %v736 = vadd.f32 %v709, %v722
    %v737 = vadd.f32 %v713, %v722
    %v738 = vadd.f32 %v717, %v722
    %v739 = vmul.f32 %v723, 0.2
    %v740 = vmul.f32 %v724, 0.2
    %v741 = vmul.f32 %v725, 0.2
    %v742 = vmul.f32 %v726, 0.2
    %v743 = vmul.f32 %v727, 0.2
    %v744 = vmul.f32 %v728, 0.2
    %v745 = vmul.f32 %v729, 0.2
    %v746 = vmul.f32 %v730, 0.2
    %v747 = vmul.f32 %v731, 0.2
    %v748 = vmul.f32 %v732, 0.2
    %v749 = vmul.f32 %v733, 0.2
    %v750 = vmul.f32 %v734, 0.2
    %v751 = vmul.f32 %v735, 0.2
    %v752 = vmul.f32 %v736, 0.2
    %v753 = vmul.f32 %v737, 0.2
    %v754 = vmul.f32 %v738, 0.2
    %v755 = vmax.f32 %v723, %v739
    %v756 = vmax.f32 %v724, %v740
    %v757 = vmax.f32 %v725, %v741
    %v758 = vmax.f32 %v726, %v742
    %v759 = vmax.f32 %v727, %v743
    %v760 = vmax.f32 %v728, %v744
    %v761 = vmax.f32 %v729, %v745
    %v762 = vmax.f32 %v730, %v746
    %v763 = vmax.f32 %v731, %v747
    %v764 = vmax.f32 %v732, %v748
    %v765 = vmax.f32 %v733, %v749
    %v766 = vmax.f32 %v734, %v750
    %v767 = vmax.f32 %v735, %v751
    %v768 = vmax.f32 %v736, %v752
    %v769 = vmax.f32 %v737, %v753
    %v770 = vmax.f32 %v738, %v754
    %v771 = vadd.f32 %v755, %v91
    %v772 = vadd.f32 %v756, %v92
    %v773 = vadd.f32 %v757, %v93
    %v774 = vadd.f32 %v758, %v94
    %v775 = vadd.f32 %v759, %v95
    %v776 = vadd.f32 %v760, %v96
    %v777 = vadd.f32 %v761, %v97
    %v778 = vadd.f32 %v762, %v98
    %v779 = vadd.f32 %v763, %v99
    %v780 = vadd.f32 %v764, %v100
    %v781 = vadd.f32 %v765, %v101
    %v782 = vadd.f32 %v766, %v102
    %v783 = vadd.f32 %v767, %v103
    %v784 = vadd.f32 %v768, %v104
    %v785 = vadd.f32 %v769, %v105
    %v786 = vadd.f32 %v770, %v106
    %787 = vmax.xlane.f32.xlu0 %v771
    %v788 = vpop.xlane.xlu0 %787
    %789 = vmax.xlane.f32.xlu0 %v772
    %v790 = vpop.xlane.xlu0 %789
    %791 = vmax.xlane.f32.xlu0 %v773
    %v792 = vpop.xlane.xlu0 %791
    %793 = vmax.xlane.f32.xlu0 %v774
    %v794 = vpop.xlane.xlu0 %793
    %795 = vmax.xlane.f32.xlu0 %v775
    %v796 = vpop.xlane.xlu0 %795
    %797 = vmax.xlane.f32.xlu0 %v776
    %v798 = vpop.xlane.xlu0 %797
    %799 = vmax.xlane.f32.xlu0 %v777
    %v800 = vpop.xlane.xlu0 %799
    %801 = vmax.xlane.f32.xlu0 %v778
    %v802 = vpop.xlane.xlu0 %801
    %803 = vmax.xlane.f32.xlu0 %v779
    %v804 = vpop.xlane.xlu0 %803
    %805 = vmax.xlane.f32.xlu0 %v780
    %v806 = vpop.xlane.xlu0 %805
    %807 = vmax.xlane.f32.xlu0 %v781
    %v808 = vpop.xlane.xlu0 %807
    %809 = vmax.xlane.f32.xlu0 %v782
    %v810 = vpop.xlane.xlu0 %809
    %811 = vmax.xlane.f32.xlu0 %v783
    %v812 = vpop.xlane.xlu0 %811
    %813 = vmax.xlane.f32.xlu0 %v784
    %v814 = vpop.xlane.xlu0 %813
    %815 = vmax.xlane.f32.xlu0 %v785
    %v816 = vpop.xlane.xlu0 %815
    %817 = vmax.xlane.f32.xlu0 %v786
    %v818 = vpop.xlane.xlu0 %817
    %v819 = vsub.f32 %v771, %v788
    %v820 = vsub.f32 %v772, %v790
    %v821 = vsub.f32 %v773, %v792
    %v822 = vsub.f32 %v774, %v794
    %v823 = vsub.f32 %v775, %v796
    %v824 = vsub.f32 %v776, %v798
    %v825 = vsub.f32 %v777, %v800
    %v826 = vsub.f32 %v778, %v802
    %v827 = vsub.f32 %v779, %v804
    %v828 = vsub.f32 %v780, %v806
    %v829 = vsub.f32 %v781, %v808
    %v830 = vsub.f32 %v782, %v810
    %v831 = vsub.f32 %v783, %v812
    %v832 = vsub.f32 %v784, %v814
    %v833 = vsub.f32 %v785, %v816
    %v834 = vsub.f32 %v786, %v818
    %v835 = vmul.f32 %v819, 1.442695
    %v836 = vpow.pop %v835
    %v837 = vmul.f32 %v820, 1.442695
    %v838 = vpow.pop %v837
    %v839 = vmul.f32 %v821, 1.442695
    %v840 = vpow.pop %v839
    %v841 = vmul.f32 %v822, 1.442695
    %v842 = vpow.pop %v841
    %v843 = vmul.f32 %v823, 1.442695
    %v844 = vpow.pop %v843
    %v845 = vmul.f32 %v824, 1.442695
    %v846 = vpow.pop %v845
    %v847 = vmul.f32 %v825, 1.442695
    %v848 = vpow.pop %v847
    %v849 = vmul.f32 %v826, 1.442695
    %v850 = vpow.pop %v849
    %v851 = vmul.f32 %v827, 1.442695
    %v852 = vpow.pop %v851
    %v853 = vmul.f32 %v828, 1.442695
    %v854 = vpow.pop %v853
    %v855 = vmul.f32 %v829, 1.442695
    %v856 = vpow.pop %v855
    %v857 = vmul.f32 %v830, 1.442695
    %v858 = vpow.pop %v857
    %v859 = vmul.f32 %v831, 1.442695
    %v860 = vpow.pop %v859
    %v861 = vmul.f32 %v832, 1.442695
    %v862 = vpow.pop %v861
    %v863 = vmul.f32 %v833, 1.442695
    %v864 = vpow.pop %v863
    %v865 = vmul.f32 %v834, 1.442695
    %v866 = vpow.pop %v865
    %v867 = vpack.c.bf16 %v838, %v836
    %v868 = vpack.c.bf16 %v842, %v840
    %v869 = vpack.c.bf16 %v846, %v844
    %v870 = vpack.c.bf16 %v850, %v848
    %v871 = vpack.c.bf16 %v854, %v852
    %v872 = vpack.c.bf16 %v858, %v856
    %v873 = vpack.c.bf16 %v862, %v860
    %v874 = vpack.c.bf16 %v866, %v864
    %875 = vmatprep.subr.bf16.mxu0 0
    %876 = vmatpush1.bf16.msra.mxu0 %v411
    %877 = vmatprep.subr.bf16.mxu0 0
    %878 = vmatpush1.bf16.msra.mxu0 %v412
    %879 = vmatprep.subr.bf16.mxu0 0
    %880 = vmatpush1.bf16.msra.mxu0 %v413
    %881 = vmatprep.subr.bf16.mxu0 0
    %882 = vmatpush1.bf16.msra.mxu0 %v414
    %883 = vmatprep.subr.bf16.mxu0 0
    %884 = vmatpush1.bf16.msra.mxu0 %v415
    %885 = vmatprep.subr.bf16.mxu0 0
    %886 = vmatpush1.bf16.msra.mxu0 %v416
    %887 = vmatprep.subr.bf16.mxu0 0
    %888 = vmatpush1.bf16.msra.mxu0 %v417
    %889 = vmatprep.subr.bf16.mxu0 0
    %890 = vmatpush1.bf16.msra.mxu0 %v418
    %891 = vmatprep.subr.bf16.mxu0 0
    %892 = vmatpush1.bf16.msra.mxu0 0
    %893 = vmatprep.subr.bf16.mxu0 0
    %894 = vmatpush1.bf16.msra.mxu0 0
    %895 = vmatprep.subr.bf16.mxu0 0
    %896 = vmatpush1.bf16.msra.mxu0 0
    %897 = vmatprep.subr.bf16.mxu0 0
    %898 = vmatpush1.bf16.msra.mxu0 0
    %899 = vmatprep.subr.bf16.mxu0 0
    %900 = vmatpush1.bf16.msra.mxu0 0
    %901 = vmatprep.subr.bf16.mxu0 0
    %902 = vmatpush1.bf16.msra.mxu0 0
    %903 = vmatprep.subr.bf16.mxu0 0
    %904 = vmatpush1.bf16.msra.mxu0 0
    %905 = vmatprep.subr.bf16.mxu0 0
    %906 = vmatpush1.bf16.msra.mxu0 0
    %907 = vmatprep.mubr.bf16.mxu0 0
    %908 = vmatmul.mubr.bf16.gmra.mrb[0].mxu0 %v867
    %v909 = vpop.f32.mrb[0].mxu0
    %v910 = vadd.f32 0.0, %v909
    %v911 = vpop.f32.mrb[0].mxu0
    %v912 = vpop.f32.mrb[0].mxu0
    %v913 = vadd.f32 0.0, %v912
    %v914 = vpop.f32.mrb[0].mxu0
    %915 = vmatprep.mubr.bf16.mxu0 0
    %916 = vmatmul.mubr.bf16.gmra.mrb[0].mxu0 %v868
    %v917 = vpop.f32.mrb[0].mxu0
    %v918 = vadd.f32 0.0, %v917
    %v919 = vpop.f32.mrb[0].mxu0
    %v920 = vpop.f32.mrb[0].mxu0
    %v921 = vadd.f32 0.0, %v920
    %v922 = vpop.f32.mrb[0].mxu0
    %923 = vmatprep.mubr.bf16.mxu0 0
    %924 = vmatmul.mubr.bf16.gmra.mrb[0].mxu0 %v869
    %v925 = vpop.f32.mrb[0].mxu0
    %v926 = vadd.f32 0.0, %v925
    %v927 = vpop.f32.mrb[0].mxu0
    %v928 = vpop.f32.mrb[0].mxu0
    %v929 = vadd.f32 0.0, %v928
    %v930 = vpop.f32.mrb[0].mxu0
    %931 = vmatprep.mubr.bf16.mxu0 0
    %932 = vmatmul.mubr.bf16.gmra.mrb[0].mxu0 %v870
    %v933 = vpop.f32.mrb[0].mxu0
    %v934 = vadd.f32 0.0, %v933
    %v935 = vpop.f32.mrb[0].mxu0
    %v936 = vpop.f32.mrb[0].mxu0
    %v937 = vadd.f32 0.0, %v936
    %v938 = vpop.f32.mrb[0].mxu0
    %939 = vmatprep.mubr.bf16.mxu0 0
    %940 = vmatmul.mubr.bf16.gmra.mrb[0].mxu0 %v871
    %v941 = vpop.f32.mrb[0].mxu0
    %v942 = vadd.f32 0.0, %v941
    %v943 = vpop.f32.mrb[0].mxu0
    %v944 = vpop.f32.mrb[0].mxu0
    %v945 = vadd.f32 0.0, %v944
    %v946 = vpop.f32.mrb[0].mxu0
    %947 = vmatprep.mubr.bf16.mxu0 0
    %948 = vmatmul.mubr.bf16.gmra.mrb[0].mxu0 %v872
    %v949 = vpop.f32.mrb[0].mxu0
    %v950 = vadd.f32 0.0, %v949
    %v951 = vpop.f32.mrb[0].mxu0
    %v952 = vpop.f32.mrb[0].mxu0
    %v953 = vadd.f32 0.0, %v952
    %v954 = vpop.f32.mrb[0].mxu0
    %955 = vmatprep.mubr.bf16.mxu0 0
    %956 = vmatmul.mubr.bf16.gmra.mrb[0].mxu0 %v873
    %v957 = vpop.f32.mrb[0].mxu0
    %v958 = vadd.f32 0.0, %v957
    %v959 = vpop.f32.mrb[0].mxu0
    %v960 = vpop.f32.mrb[0].mxu0
    %v961 = vadd.f32 0.0, %v960
    %v962 = vpop.f32.mrb[0].mxu0
    %963 = vmatprep.mubr.bf16.mxu0 0
    %964 = vmatmul.mubr.bf16.gmra.mrb[0].mxu0 %v874
    %v965 = vpop.f32.mrb[0].mxu0
    %v966 = vadd.f32 0.0, %v965
    %v967 = vpop.f32.mrb[0].mxu0
    %v968 = vpop.f32.mrb[0].mxu0
    %v969 = vadd.f32 0.0, %v968
    %v970 = vpop.f32.mrb[0].mxu0
    %971 = vdwg.mxu0
    %v972 = vrcp.pop %v910
    %v973 = vrcp.pop %v913
    %v974 = vrcp.pop %v918
    %v975 = vrcp.pop %v921
    %v976 = vrcp.pop %v926
    %v977 = vrcp.pop %v929
    %v978 = vrcp.pop %v934
    %v979 = vrcp.pop %v937
    %v980 = vrcp.pop %v942
    %v981 = vrcp.pop %v945
    %v982 = vrcp.pop %v950
    %v983 = vrcp.pop %v953
    %v984 = vrcp.pop %v958
    %v985 = vrcp.pop %v961
    %v986 = vrcp.pop %v966
    %v987 = vrcp.pop %v969
    %989 = vset.pattern.permute.xlu0 64
    %990 = vperm.xlu0 %989, %v972
    %v991 = vpop.permute.xlu0 %990
    %994 = vset.pattern.permute.xlu0 64
    %995 = vperm.xlu0 %994, %v973
    %v996 = vpop.permute.xlu0 %995
    %999 = vset.pattern.permute.xlu0 64
    %1000 = vperm.xlu0 %999, %v974
    %v1001 = vpop.permute.xlu0 %1000
    %1004 = vset.pattern.permute.xlu0 64
    %1005 = vperm.xlu0 %1004, %v975
    %v1006 = vpop.permute.xlu0 %1005
    %1009 = vset.pattern.permute.xlu0 64
    %1010 = vperm.xlu0 %1009, %v976
    %v1011 = vpop.permute.xlu0 %1010
    %1014 = vset.pattern.permute.xlu0 64
    %1015 = vperm.xlu0 %1014, %v977
    %v1016 = vpop.permute.xlu0 %1015
    %1019 = vset.pattern.permute.xlu0 64
    %1020 = vperm.xlu0 %1019, %v978
    %v1021 = vpop.permute.xlu0 %1020
    %1024 = vset.pattern.permute.xlu0 64
    %1025 = vperm.xlu0 %1024, %v979
    %v1026 = vpop.permute.xlu0 %1025
    %1029 = vset.pattern.permute.xlu0 64
    %1030 = vperm.xlu0 %1029, %v980
    %v1031 = vpop.permute.xlu0 %1030
    %1034 = vset.pattern.permute.xlu0 64
    %1035 = vperm.xlu0 %1034, %v981
    %v1036 = vpop.permute.xlu0 %1035
    %1039 = vset.pattern.permute.xlu0 64
    %1040 = vperm.xlu0 %1039, %v982
    %v1041 = vpop.permute.xlu0 %1040
    %1044 = vset.pattern.permute.xlu0 64
    %1045 = vperm.xlu0 %1044, %v983
    %v1046 = vpop.permute.xlu0 %1045
    %1049 = vset.pattern.permute.xlu0 64
    %1050 = vperm.xlu0 %1049, %v984
    %v1051 = vpop.permute.xlu0 %1050
    %1054 = vset.pattern.permute.xlu0 64
    %1055 = vperm.xlu0 %1054, %v985
    %v1056 = vpop.permute.xlu0 %1055
    %1059 = vset.pattern.permute.xlu0 64
    %1060 = vperm.xlu0 %1059, %v986
    %v1061 = vpop.permute.xlu0 %1060
    %1064 = vset.pattern.permute.xlu0 64
    %1065 = vperm.xlu0 %1064, %v987
    %v1066 = vpop.permute.xlu0 %1065
    %v1068 = vmul.f32 %v910, %v991
    %v1069 = vmul.f32 %v913, %v996
    %v1070 = vmul.f32 %v918, %v1001
    %v1071 = vmul.f32 %v921, %v1006
    %v1072 = vmul.f32 %v926, %v1011
    %v1073 = vmul.f32 %v929, %v1016
    %v1074 = vmul.f32 %v934, %v1021
    %v1075 = vmul.f32 %v937, %v1026
    %v1076 = vmul.f32 %v942, %v1031
    %v1077 = vmul.f32 %v945, %v1036
    %v1078 = vmul.f32 %v950, %v1041
    %v1079 = vmul.f32 %v953, %v1046
    %v1080 = vmul.f32 %v958, %v1051
    %v1081 = vmul.f32 %v961, %v1056
    %v1082 = vmul.f32 %v966, %v1061
    %v1083 = vmul.f32 %v969, %v1066
    %vm1084 = vcmp.ge.s32.totalorder %v142, 32
    %vm1085 = vcmp.lt.s32.totalorder %v142, 64
    %vm1086 = vmand %vm1084, %vm1085
    %v1087 = vsel %vm1086, %v1068, %v639
    %v1088 = vsel %vm1086, %v1069, %v640
    %v1089 = vsel %vm1086, %v1070, %v641
    %v1090 = vsel %vm1086, %v1071, %v642
    %v1091 = vsel %vm1086, %v1072, %v643
    %v1092 = vsel %vm1086, %v1073, %v644
    %v1093 = vsel %vm1086, %v1074, %v645
    %v1094 = vsel %vm1086, %v1075, %v646
    %v1095 = vsel %vm1086, %v1076, %v647
    %v1096 = vsel %vm1086, %v1077, %v648
    %v1097 = vsel %vm1086, %v1078, %v649
    %v1098 = vsel %vm1086, %v1079, %v650
    %v1099 = vsel %vm1086, %v1080, %v651
    %v1100 = vsel %vm1086, %v1081, %v652
    %v1101 = vsel %vm1086, %v1082, %v653
    %v1102 = vsel %vm1086, %v1083, %v654
    %v1104 = vlaneseq
    %v1105 = vshrl.u32 %v1104, 7
    %v1106 = vsub.s32 0, %v1105
    %v1107 = vrot.slane %v140, %v1106
    %v1109 = vadd.f32 %v1087, %v1107
    %v1110 = vadd.f32 %v1088, %v1107
    %v1111 = vadd.f32 %v1089, %v1107
    %v1112 = vadd.f32 %v1090, %v1107
    %v1113 = vadd.f32 %v1091, %v1107
    %v1114 = vadd.f32 %v1092, %v1107
    %v1115 = vadd.f32 %v1093, %v1107
    %v1116 = vadd.f32 %v1094, %v1107
    %v1117 = vadd.f32 %v1095, %v1107
    %v1118 = vadd.f32 %v1096, %v1107
    %v1119 = vadd.f32 %v1097, %v1107
    %v1120 = vadd.f32 %v1098, %v1107
    %v1121 = vadd.f32 %v1099, %v1107
    %v1122 = vadd.f32 %v1100, %v1107
    %v1123 = vadd.f32 %v1101, %v1107
    %v1124 = vadd.f32 %v1102, %v1107
    %vm1125 = vcmp.gt.f32.partialorder %v1109, 0.0
    %vm1126 = vcmp.gt.f32.partialorder %v1110, 0.0
    %vm1127 = vcmp.gt.f32.partialorder %v1111, 0.0
    %vm1128 = vcmp.gt.f32.partialorder %v1112, 0.0
    %vm1129 = vcmp.gt.f32.partialorder %v1113, 0.0
    %vm1130 = vcmp.gt.f32.partialorder %v1114, 0.0
    %vm1131 = vcmp.gt.f32.partialorder %v1115, 0.0
    %vm1132 = vcmp.gt.f32.partialorder %v1116, 0.0
    %vm1133 = vcmp.gt.f32.partialorder %v1117, 0.0
    %vm1134 = vcmp.gt.f32.partialorder %v1118, 0.0
    %vm1135 = vcmp.gt.f32.partialorder %v1119, 0.0
    %vm1136 = vcmp.gt.f32.partialorder %v1120, 0.0
    %vm1137 = vcmp.gt.f32.partialorder %v1121, 0.0
    %vm1138 = vcmp.gt.f32.partialorder %v1122, 0.0
    %vm1139 = vcmp.gt.f32.partialorder %v1123, 0.0
    %vm1140 = vcmp.gt.f32.partialorder %v1124, 0.0
    %v1141 = vmul.f32 %v1109, 1.442695
    %v1142 = vpow.pop %v1141
    %v1143 = vmul.f32 %v1110, 1.442695
    %v1144 = vpow.pop %v1143
    %v1145 = vmul.f32 %v1111, 1.442695
    %v1146 = vpow.pop %v1145
    %v1147 = vmul.f32 %v1112, 1.442695
    %v1148 = vpow.pop %v1147
    %v1149 = vmul.f32 %v1113, 1.442695
    %v1150 = vpow.pop %v1149
    %v1151 = vmul.f32 %v1114, 1.442695
    %v1152 = vpow.pop %v1151
    %v1153 = vmul.f32 %v1115, 1.442695
    %v1154 = vpow.pop %v1153
    %v1155 = vmul.f32 %v1116, 1.442695
    %v1156 = vpow.pop %v1155
    %v1157 = vmul.f32 %v1117, 1.442695
    %v1158 = vpow.pop %v1157
    %v1159 = vmul.f32 %v1118, 1.442695
    %v1160 = vpow.pop %v1159
    %v1161 = vmul.f32 %v1119, 1.442695
    %v1162 = vpow.pop %v1161
    %v1163 = vmul.f32 %v1120, 1.442695
    %v1164 = vpow.pop %v1163
    %v1165 = vmul.f32 %v1121, 1.442695
    %v1166 = vpow.pop %v1165
    %v1167 = vmul.f32 %v1122, 1.442695
    %v1168 = vpow.pop %v1167
    %v1169 = vmul.f32 %v1123, 1.442695
    %v1170 = vpow.pop %v1169
    %v1171 = vmul.f32 %v1124, 1.442695
    %v1172 = vpow.pop %v1171
    %v1173 = vsub.f32 %v1142, 1.0
    %v1174 = vsub.f32 %v1144, 1.0
    %v1175 = vsub.f32 %v1146, 1.0
    %v1176 = vsub.f32 %v1148, 1.0
    %v1177 = vsub.f32 %v1150, 1.0
    %v1178 = vsub.f32 %v1152, 1.0
    %v1179 = vsub.f32 %v1154, 1.0
    %v1180 = vsub.f32 %v1156, 1.0
    %v1181 = vsub.f32 %v1158, 1.0
    %v1182 = vsub.f32 %v1160, 1.0
    %v1183 = vsub.f32 %v1162, 1.0
    %v1184 = vsub.f32 %v1164, 1.0
    %v1185 = vsub.f32 %v1166, 1.0
    %v1186 = vsub.f32 %v1168, 1.0
    %v1187 = vsub.f32 %v1170, 1.0
    %v1188 = vsub.f32 %v1172, 1.0
    %v1189 = vsel %vm1125, %v1109, %v1173
    %v1190 = vsel %vm1126, %v1110, %v1174
    %v1191 = vsel %vm1127, %v1111, %v1175
    %v1192 = vsel %vm1128, %v1112, %v1176
    %v1193 = vsel %vm1129, %v1113, %v1177
    %v1194 = vsel %vm1130, %v1114, %v1178
    %v1195 = vsel %vm1131, %v1115, %v1179
    %v1196 = vsel %vm1132, %v1116, %v1180
    %v1197 = vsel %vm1133, %v1117, %v1181
    %v1198 = vsel %vm1134, %v1118, %v1182
    %v1199 = vsel %vm1135, %v1119, %v1183
    %v1200 = vsel %vm1136, %v1120, %v1184
    %v1201 = vsel %vm1137, %v1121, %v1185
    %v1202 = vsel %vm1138, %v1122, %v1186
    %v1203 = vsel %vm1139, %v1123, %v1187
    %v1204 = vsel %vm1140, %v1124, %v1188
    %v1205 = vpack.c.bf16 %v1190, %v1189
    %v1206 = vpack.c.bf16 %v1192, %v1191
    %v1207 = vpack.c.bf16 %v1194, %v1193
    %v1208 = vpack.c.bf16 %v1196, %v1195
    %v1209 = vpack.c.bf16 %v1198, %v1197
    %v1210 = vpack.c.bf16 %v1200, %v1199
    %v1211 = vpack.c.bf16 %v1202, %v1201
    %v1212 = vpack.c.bf16 %v1204, %v1203
    %v1221 = vunpack.c.l.b16 %v1205
    %v1222 = vunpack.c.h.b16 %v1205
    %v1223 = vunpack.c.l.b16 %v1206
    %v1224 = vunpack.c.h.b16 %v1206
    %v1225 = vunpack.c.l.b16 %v1207
    %v1226 = vunpack.c.h.b16 %v1207
    %v1227 = vunpack.c.l.b16 %v1208
    %v1228 = vunpack.c.h.b16 %v1208
    %v1229 = vunpack.c.l.b16 %v1209
    %v1230 = vunpack.c.h.b16 %v1209
    %v1231 = vunpack.c.l.b16 %v1210
    %v1232 = vunpack.c.h.b16 %v1210
    %v1233 = vunpack.c.l.b16 %v1211
    %v1234 = vunpack.c.h.b16 %v1211
    %v1235 = vunpack.c.l.b16 %v1212
    %v1236 = vunpack.c.h.b16 %v1212
    %v1237 = vpack.c.b16 %v1221, %v1221
    %v1238 = vpack.c.b16 %v1222, %v1222
    %v1239 = vpack.c.b16 %v1223, %v1223
    %v1240 = vpack.c.b16 %v1224, %v1224
    %v1241 = vpack.c.b16 %v1225, %v1225
    %v1242 = vpack.c.b16 %v1226, %v1226
    %v1243 = vpack.c.b16 %v1227, %v1227
    %v1244 = vpack.c.b16 %v1228, %v1228
    %v1245 = vpack.c.b16 %v1229, %v1229
    %v1246 = vpack.c.b16 %v1230, %v1230
    %v1247 = vpack.c.b16 %v1231, %v1231
    %v1248 = vpack.c.b16 %v1232, %v1232
    %v1249 = vpack.c.b16 %v1233, %v1233
    %v1250 = vpack.c.b16 %v1234, %v1234
    %v1251 = vpack.c.b16 %v1235, %v1235
    %v1252 = vpack.c.b16 %v1236, %v1236
    %1269 = vst [vmem:[#allocation10] sm:$0xf] %v1237
    %1270 = vst [vmem:[#allocation10 + $0x4] sm:$0xf] %v1238
    %1271 = vst [vmem:[#allocation10 + $0x8] sm:$0xf] %v1239
    %1272 = vst [vmem:[#allocation10 + $0xc] sm:$0xf] %v1240
    %1273 = vst [vmem:[#allocation10 + $0x10] sm:$0xf] %v1241
    %1274 = vst [vmem:[#allocation10 + $0x14] sm:$0xf] %v1242
    %1275 = vst [vmem:[#allocation10 + $0x18] sm:$0xf] %v1243
    %1276 = vst [vmem:[#allocation10 + $0x1c] sm:$0xf] %v1244
    %1277 = vst [vmem:[#allocation10 + $0x20] sm:$0xf] %v1245
    %1278 = vst [vmem:[#allocation10 + $0x24] sm:$0xf] %v1246
    %1279 = vst [vmem:[#allocation10 + $0x28] sm:$0xf] %v1247
    %1280 = vst [vmem:[#allocation10 + $0x2c] sm:$0xf] %v1248
    %1281 = vst [vmem:[#allocation10 + $0x30] sm:$0xf] %v1249
    %1282 = vst [vmem:[#allocation10 + $0x34] sm:$0xf] %v1250
    %1283 = vst [vmem:[#allocation10 + $0x38] sm:$0xf] %v1251
    %1284 = vst [vmem:[#allocation10 + $0x3c] sm:$0xf] %v1252
    // Predicated region
    $region38: #{tpu_custom_call.1} parent=1 // pred_check
      _
    $region39: #{tpu_custom_call.1} parent=1 // pred_check_branch
      %1286 = sbr.rel (0) target = $region41
    $region40: #{tpu_custom_call.1} parent=1 // pred_region
      %s1288 = ssub.s32 1024, 1024
      %1289 = vsyncadd [#allocation4], %s1288
      %s1290 = sshll.u32 [#allocation10], 4
      %s1291 = int_to_ptr.vmem [resolvable:$true] %s1290
      %1296 = dma.vmem_to_hbm [thread:$0]  %s1291, 1024, %s5, [#allocation4], 64, 64, 4
    $region41: #{tpu_custom_call.1} parent=1 // pred_fallthru
      _
    // Predicated region
    $region42: #{tpu_custom_call.1} parent=1 // pred_check
      _
    $region43: #{tpu_custom_call.1} parent=1 // pred_check_branch
      %1298 = sbr.rel (0) target = $region45
    $region44: #{tpu_custom_call.1} parent=1 // pred_region
      %1299 = dma.done [#allocation4], 1024
    $region45: #{tpu_custom_call.1} parent=1 // pred_fallthru
      _
    %1300 = vsyncpa [#allocation3], 1
    %1301 = vsyncpa [#allocation6], 1
    %1302 = vsyncpa [#allocation9], 1
    %1303 = vsyncpa [#allocation4], 1

</llo_original>
